<compile_context>
chip_gen: v6e
topology: v6e:2x2x1
jax: 0.10.0
libtpu: 0.0.40
codegen_flags: <defaults>
</compile_context>

<pallas_src>
import functools

import jax
import jax.numpy as jnp
from jax.experimental import pallas as pl
from jax.experimental.pallas import tpu as pltpu


def _c1_kernel(x_ref, w3_ref, bias_ref, w1_ref, b1_ref, o_ref,
               xpad_ref, patch_ref, *, Bt, H, W, Cin, Cmid, Cout):
    # x_ref:     (Bt, H, W, Cin)       bf16 unpadded input block (NHWC)
    # w3_ref:    (9*Cin, Cmid)         bf16 conv3x3 weights, BN-scale folded
    # bias_ref:  (1, Cmid)             f32 folded BN bias
    # w1_ref:    (Cmid, Cout)          bf16 1x1 conv weights
    # b1_ref:    (1, Cout)             f32 1x1 conv bias
    # o_ref:     (Bt, H*W, Cout)       f32 log-softmax output
    # xpad_ref:  (Bt, H+2, W+2, Cin)   bf16 VMEM scratch (zero-padded input)
    # patch_ref: (Bt*H*W, 9*Cin)       bf16 VMEM scratch (im2col patch matrix)
    M = Bt * H * W

    # Zero-pad inside the kernel (no wrapper-side jnp.pad HBM pass). The whole
    # scratch is cleared every step so correctness does not depend on which
    # core ran grid step 0 ("parallel" axis / megacore safe).
    xpad_ref[...] = jnp.zeros((Bt, H + 2, W + 2, Cin), jnp.bfloat16)
    xpad_ref[:, 1:H + 1, 1:W + 1, :] = x_ref[...]

    # im2col: build one (M, 9*Cin) patch matrix -> a single K=9*Cin matmul
    # instead of 9 separate K=Cin matmuls + 8 VPU accumulates.
    for dy in range(3):
        for dx in range(3):
            k = dy * 3 + dx
            patch_ref[:, k * Cin:(k + 1) * Cin] = (
                xpad_ref[:, dy:dy + H, dx:dx + W, :].reshape(M, Cin))

    # conv3x3 (BN scale pre-folded into w3): bf16 operands, f32 accumulation.
    acc = jnp.dot(patch_ref[...], w3_ref[...],
                  preferred_element_type=jnp.float32)          # (M, Cmid) f32

    # BN bias + ReLU (f32 elementwise; v5e has no bf16 VPU/EUP).
    y = jnp.maximum(acc + bias_ref[...], 0.0)

    # 1x1 conv == channel matmul + bias.
    z = jnp.dot(y.astype(jnp.bfloat16), w1_ref[...],
                preferred_element_type=jnp.float32) + b1_ref[...]  # (M, Cout)

    # log_softmax over the class (lane) axis, f32.
    z_max = jnp.max(z, axis=-1, keepdims=True)
    z_shift = z - z_max
    lse = jnp.log(jnp.sum(jnp.exp(z_shift), axis=-1, keepdims=True))
    out = z_shift - lse

    o_ref[...] = out.reshape(Bt, H * W, Cout)


def _pick_block_batch(N, H, W, Cin, Cout):
    """Largest divisor of N whose per-step VMEM footprint stays modest."""
    per_img = (2 * H * W * Cin * 2              # bf16 input, double-buffered
               + (H + 2) * (W + 2) * Cin * 2    # padded-input scratch
               + H * W * 9 * Cin * 2            # im2col patch scratch
               + 2 * H * W * Cout * 4)          # f32 output, double-buffered
    budget = 24 * 1024 * 1024                   # headroom even on v7x (64 MiB)
    cap = max(1, min(N, budget // max(per_img, 1)))
    for bt in range(cap, 0, -1):
        if N % bt == 0:
            return bt
    return 1


def c1_forward(x_nchw, params):
    """C1.forward with segSize=None (log_softmax path).

    x_nchw: (N, Cin, H, W) float32
    returns: (N, num_class, H, W) float32
    """
    w3 = params["w3"]            # (3, 3, Cin, Cmid) HWIO
    w1 = params["w1"]            # (Cmid, Cout)
    b1 = params["b1"]            # (Cout,)
    eps = 1e-5

    N, Cin, H, W = x_nchw.shape
    Cmid = w3.shape[-1]
    Cout = w1.shape[-1]

    # Fold BN (eval-mode running stats) into the conv weights + a bias.
    scale = params["bn_gamma"] / jnp.sqrt(params["bn_var"] + eps)   # (Cmid,)
    bias = params["bn_beta"] - params["bn_mean"] * scale            # (Cmid,)
    # (3,3,Cin,Cmid) * scale over Cmid, flattened (dy, dx, cin) for im2col.
    w3_folded = (w3 * scale[None, None, None, :]).reshape(9 * Cin, Cmid)

    Bt = _pick_block_batch(N, H, W, Cin, Cout)

    # NCHW -> NHWC + bf16 cast: one fused XLA pass (no separate pad pass).
    x_nhwc = jnp.transpose(x_nchw, (0, 2, 3, 1)).astype(jnp.bfloat16)

    kernel = functools.partial(_c1_kernel, Bt=Bt, H=H, W=W, Cin=Cin,
                               Cmid=Cmid, Cout=Cout)

    out = pl.pallas_call(
        kernel,
        out_shape=jax.ShapeDtypeStruct((N, H * W, Cout), jnp.float32),
        grid_spec=pltpu.PrefetchScalarGridSpec(
            num_scalar_prefetch=0,
            grid=(N // Bt,),
            in_specs=[
                pl.BlockSpec((Bt, H, W, Cin), lambda n: (n, 0, 0, 0)),
                pl.BlockSpec((9 * Cin, Cmid), lambda n: (0, 0)),
                pl.BlockSpec((1, Cmid), lambda n: (0, 0)),
                pl.BlockSpec((Cmid, Cout), lambda n: (0, 0)),
                pl.BlockSpec((1, Cout), lambda n: (0, 0)),
            ],
            out_specs=pl.BlockSpec((Bt, H * W, Cout), lambda n: (n, 0, 0)),
            scratch_shapes=[
                pltpu.VMEM((Bt, H + 2, W + 2, Cin), jnp.bfloat16),
                pltpu.VMEM((Bt * H * W, 9 * Cin), jnp.bfloat16),
            ],
        ),
        compiler_params=pltpu.CompilerParams(
            dimension_semantics=("parallel",)),
    )(
        x_nhwc,
        w3_folded.astype(jnp.bfloat16),
        bias.reshape(1, Cmid).astype(jnp.float32),
        w1.astype(jnp.bfloat16),
        b1.reshape(1, Cout).astype(jnp.float32),
    )

    # (N, H*W, Cout) -> (N, Cout, H, W) to match the PyTorch module output.
    return jnp.transpose(out.reshape(N, H, W, Cout), (0, 3, 1, 2))


def _reference_forward(x_nchw, params):
    """Pure-JAX f32 reference (same math) for a correctness sanity check."""
    eps = 1e-5
    w3 = params["w3"]
    scale = params["bn_gamma"] / jnp.sqrt(params["bn_var"] + eps)
    bias = params["bn_beta"] - params["bn_mean"] * scale

    y = jax.lax.conv_general_dilated(
        x_nchw, w3, window_strides=(1, 1), padding="SAME",
        dimension_numbers=("NCHW", "HWIO", "NCHW"))
    y = y * scale[None, :, None, None] + bias[None, :, None, None]
    y = jnp.maximum(y, 0.0)
    z = jnp.einsum("nchw,cd->ndhw", y, params["w1"]) + \
        params["b1"][None, :, None, None]
    return jax.nn.log_softmax(z, axis=1)


if __name__ == "__main__":
    # Small, C1-consistent shapes: fc_dim=32 -> mid=8, num_class=16, 8x8 maps.
    N, Cin, H, W = 2, 32, 8, 8
    Cmid = Cin // 4
    num_class = 16

    key = jax.random.PRNGKey(0)
    k_x, k_w3, k_g, k_b, k_m, k_v, k_w1, k_b1 = jax.random.split(key, 8)

    x = jax.random.normal(k_x, (N, Cin, H, W), dtype=jnp.float32)

    params = {
        "w3": jax.random.normal(k_w3, (3, 3, Cin, Cmid), jnp.float32) * 0.05,
        "bn_gamma": 1.0 + 0.1 * jax.random.normal(k_g, (Cmid,), jnp.float32),
        "bn_beta": 0.1 * jax.random.normal(k_b, (Cmid,), jnp.float32),
        "bn_mean": 0.1 * jax.random.normal(k_m, (Cmid,), jnp.float32),
        "bn_var": jnp.abs(jax.random.normal(k_v, (Cmid,), jnp.float32)) + 0.5,
        "w1": jax.random.normal(k_w1, (Cmid, num_class), jnp.float32) * 0.1,
        "b1": 0.01 * jax.random.normal(k_b1, (num_class,), jnp.float32),
    }

    out = jax.block_until_ready(c1_forward(x, params))
    ref = jax.block_until_ready(_reference_forward(x, params))

    assert out.shape == (N, num_class, H, W), out.shape
    # bf16 MXU operands vs f32 reference -> loosened tolerance (acc is f32).
    max_err = float(jnp.max(jnp.abs(out - ref)))
    assert jnp.allclose(out, ref, atol=5e-2, rtol=5e-2), max_err

    print("KERNEL_OK")
</pallas_src>

<mosaic_0001>
module attributes {stable_mosaic.version = 11 : i64} {
  func.func @_c1_kernel(%arg0: i32, %arg1: memref<2x8x8x32xbf16, #tpu.memory_space<vmem>>, %arg2: memref<288x8xbf16, #tpu.memory_space<vmem>>, %arg3: memref<1x8xf32, #tpu.memory_space<vmem>>, %arg4: memref<8x16xbf16, #tpu.memory_space<vmem>>, %arg5: memref<1x16xf32, #tpu.memory_space<vmem>>, %arg6: memref<2x64x16xf32, #tpu.memory_space<vmem>>, %arg7: memref<2x10x10x32xbf16, #tpu.memory_space<vmem>>, %arg8: memref<128x288xbf16, #tpu.memory_space<vmem>>) attributes {dimension_semantics = [#tpu.dimension_semantics<parallel>], iteration_bounds = array<i64: 1>, scalar_prefetch = 0 : i64, scratch_operands = 2 : i64, tpu.core_type = #tpu.core_type<tc>, window_params = [{transform_indices = @transform_0, window_bounds = array<i64: 2, 8, 8, 32>}, {pipeline_mode = #tpu.pipeline_mode<synchronous>, transform_indices = @transform_1, window_bounds = array<i64: 288, 8>}, {pipeline_mode = #tpu.pipeline_mode<synchronous>, transform_indices = @transform_2, window_bounds = array<i64: 1, 8>}, {pipeline_mode = #tpu.pipeline_mode<synchronous>, transform_indices = @transform_3, window_bounds = array<i64: 8, 16>}, {pipeline_mode = #tpu.pipeline_mode<synchronous>, transform_indices = @transform_4, window_bounds = array<i64: 1, 16>}, {transform_indices = @transform_5, window_bounds = array<i64: 2, 64, 16>}]} {
    %cst = arith.constant 0.000000e+00 : bf16
    %0 = vector.broadcast %cst : bf16 to vector<2x10x10x32xbf16>
    %c0 = arith.constant 0 : index
    %c0_0 = arith.constant 0 : index
    %c0_1 = arith.constant 0 : index
    %c0_2 = arith.constant 0 : index
    %1 = vector.load %arg7[%c0, %c0_0, %c0_1, %c0_2] : memref<2x10x10x32xbf16, #tpu.memory_space<vmem>>, vector<2x10x10x32xbf16>
    tpu.vector_store %arg7[%c0, %c0_0, %c0_1, %c0_2], %0 {strides = array<i32>} : memref<2x10x10x32xbf16, #tpu.memory_space<vmem>>, vector<2x10x10x32xbf16>,
    %c0_3 = arith.constant 0 : index
    %c0_4 = arith.constant 0 : index
    %c0_5 = arith.constant 0 : index
    %c0_6 = arith.constant 0 : index
    %2 = vector.load %arg1[%c0_3, %c0_4, %c0_5, %c0_6] : memref<2x8x8x32xbf16, #tpu.memory_space<vmem>>, vector<2x8x8x32xbf16>
    %c0_7 = arith.constant 0 : index
    %c1 = arith.constant 1 : index
    %c1_8 = arith.constant 1 : index
    %c0_9 = arith.constant 0 : index
    %3 = vector.load %arg7[%c0_7, %c1, %c1_8, %c0_9] : memref<2x10x10x32xbf16, #tpu.memory_space<vmem>>, vector<2x8x8x32xbf16>
    tpu.vector_store %arg7[%c0_7, %c1, %c1_8, %c0_9], %2 {strides = array<i32>} : memref<2x10x10x32xbf16, #tpu.memory_space<vmem>>, vector<2x8x8x32xbf16>,
    %c0_10 = arith.constant 0 : index
    %c0_11 = arith.constant 0 : index
    %c0_12 = arith.constant 0 : index
    %c0_13 = arith.constant 0 : index
    %4 = vector.load %arg7[%c0_10, %c0_11, %c0_12, %c0_13] : memref<2x10x10x32xbf16, #tpu.memory_space<vmem>>, vector<2x8x8x32xbf16>
    %5 = vector.shape_cast %4 : vector<2x8x8x32xbf16> to vector<128x32xbf16>
    %c0_14 = arith.constant 0 : index
    %c0_15 = arith.constant 0 : index
    %6 = vector.load %arg8[%c0_14, %c0_15] : memref<128x288xbf16, #tpu.memory_space<vmem>>, vector<128x32xbf16>
    tpu.vector_store %arg8[%c0_14, %c0_15], %5 {strides = array<i32>} : memref<128x288xbf16, #tpu.memory_space<vmem>>, vector<128x32xbf16>,
    %c0_16 = arith.constant 0 : index
    %c0_17 = arith.constant 0 : index
    %c1_18 = arith.constant 1 : index
    %c0_19 = arith.constant 0 : index
    %7 = vector.load %arg7[%c0_16, %c0_17, %c1_18, %c0_19] : memref<2x10x10x32xbf16, #tpu.memory_space<vmem>>, vector<2x8x8x32xbf16>
    %8 = vector.shape_cast %7 : vector<2x8x8x32xbf16> to vector<128x32xbf16>
    %c0_20 = arith.constant 0 : index
    %c32 = arith.constant 32 : index
    %9 = vector.load %arg8[%c0_20, %c32] : memref<128x288xbf16, #tpu.memory_space<vmem>>, vector<128x32xbf16>
    tpu.vector_store %arg8[%c0_20, %c32], %8 {strides = array<i32>} : memref<128x288xbf16, #tpu.memory_space<vmem>>, vector<128x32xbf16>,
    %c0_21 = arith.constant 0 : index
    %c0_22 = arith.constant 0 : index
    %c2 = arith.constant 2 : index
    %c0_23 = arith.constant 0 : index
    %10 = vector.load %arg7[%c0_21, %c0_22, %c2, %c0_23] : memref<2x10x10x32xbf16, #tpu.memory_space<vmem>>, vector<2x8x8x32xbf16>
    %11 = vector.shape_cast %10 : vector<2x8x8x32xbf16> to vector<128x32xbf16>
    %c0_24 = arith.constant 0 : index
    %c64 = arith.constant 64 : index
    %12 = vector.load %arg8[%c0_24, %c64] : memref<128x288xbf16, #tpu.memory_space<vmem>>, vector<128x32xbf16>
    tpu.vector_store %arg8[%c0_24, %c64], %11 {strides = array<i32>} : memref<128x288xbf16, #tpu.memory_space<vmem>>, vector<128x32xbf16>,
    %c0_25 = arith.constant 0 : index
    %c1_26 = arith.constant 1 : index
    %c0_27 = arith.constant 0 : index
    %c0_28 = arith.constant 0 : index
    %13 = vector.load %arg7[%c0_25, %c1_26, %c0_27, %c0_28] : memref<2x10x10x32xbf16, #tpu.memory_space<vmem>>, vector<2x8x8x32xbf16>
    %14 = vector.shape_cast %13 : vector<2x8x8x32xbf16> to vector<128x32xbf16>
    %c0_29 = arith.constant 0 : index
    %c96 = arith.constant 96 : index
    %15 = vector.load %arg8[%c0_29, %c96] : memref<128x288xbf16, #tpu.memory_space<vmem>>, vector<128x32xbf16>
    tpu.vector_store %arg8[%c0_29, %c96], %14 {strides = array<i32>} : memref<128x288xbf16, #tpu.memory_space<vmem>>, vector<128x32xbf16>,
    %c0_30 = arith.constant 0 : index
    %c1_31 = arith.constant 1 : index
    %c1_32 = arith.constant 1 : index
    %c0_33 = arith.constant 0 : index
    %16 = vector.load %arg7[%c0_30, %c1_31, %c1_32, %c0_33] : memref<2x10x10x32xbf16, #tpu.memory_space<vmem>>, vector<2x8x8x32xbf16>
    %17 = vector.shape_cast %16 : vector<2x8x8x32xbf16> to vector<128x32xbf16>
    %c0_34 = arith.constant 0 : index
    %c128 = arith.constant 128 : index
    %18 = vector.load %arg8[%c0_34, %c128] : memref<128x288xbf16, #tpu.memory_space<vmem>>, vector<128x32xbf16>
    tpu.vector_store %arg8[%c0_34, %c128], %17 {strides = array<i32>} : memref<128x288xbf16, #tpu.memory_space<vmem>>, vector<128x32xbf16>,
    %c0_35 = arith.constant 0 : index
    %c1_36 = arith.constant 1 : index
    %c2_37 = arith.constant 2 : index
    %c0_38 = arith.constant 0 : index
    %19 = vector.load %arg7[%c0_35, %c1_36, %c2_37, %c0_38] : memref<2x10x10x32xbf16, #tpu.memory_space<vmem>>, vector<2x8x8x32xbf16>
    %20 = vector.shape_cast %19 : vector<2x8x8x32xbf16> to vector<128x32xbf16>
    %c0_39 = arith.constant 0 : index
    %c160 = arith.constant 160 : index
    %21 = vector.load %arg8[%c0_39, %c160] : memref<128x288xbf16, #tpu.memory_space<vmem>>, vector<128x32xbf16>
    tpu.vector_store %arg8[%c0_39, %c160], %20 {strides = array<i32>} : memref<128x288xbf16, #tpu.memory_space<vmem>>, vector<128x32xbf16>,
    %c0_40 = arith.constant 0 : index
    %c2_41 = arith.constant 2 : index
    %c0_42 = arith.constant 0 : index
    %c0_43 = arith.constant 0 : index
    %22 = vector.load %arg7[%c0_40, %c2_41, %c0_42, %c0_43] : memref<2x10x10x32xbf16, #tpu.memory_space<vmem>>, vector<2x8x8x32xbf16>
    %23 = vector.shape_cast %22 : vector<2x8x8x32xbf16> to vector<128x32xbf16>
    %c0_44 = arith.constant 0 : index
    %c192 = arith.constant 192 : index
    %24 = vector.load %arg8[%c0_44, %c192] : memref<128x288xbf16, #tpu.memory_space<vmem>>, vector<128x32xbf16>
    tpu.vector_store %arg8[%c0_44, %c192], %23 {strides = array<i32>} : memref<128x288xbf16, #tpu.memory_space<vmem>>, vector<128x32xbf16>,
    %c0_45 = arith.constant 0 : index
    %c2_46 = arith.constant 2 : index
    %c1_47 = arith.constant 1 : index
    %c0_48 = arith.constant 0 : index
    %25 = vector.load %arg7[%c0_45, %c2_46, %c1_47, %c0_48] : memref<2x10x10x32xbf16, #tpu.memory_space<vmem>>, vector<2x8x8x32xbf16>
    %26 = vector.shape_cast %25 : vector<2x8x8x32xbf16> to vector<128x32xbf16>
    %c0_49 = arith.constant 0 : index
    %c224 = arith.constant 224 : index
    %27 = vector.load %arg8[%c0_49, %c224] : memref<128x288xbf16, #tpu.memory_space<vmem>>, vector<128x32xbf16>
    tpu.vector_store %arg8[%c0_49, %c224], %26 {strides = array<i32>} : memref<128x288xbf16, #tpu.memory_space<vmem>>, vector<128x32xbf16>,
    %c0_50 = arith.constant 0 : index
    %c2_51 = arith.constant 2 : index
    %c2_52 = arith.constant 2 : index
    %c0_53 = arith.constant 0 : index
    %28 = vector.load %arg7[%c0_50, %c2_51, %c2_52, %c0_53] : memref<2x10x10x32xbf16, #tpu.memory_space<vmem>>, vector<2x8x8x32xbf16>
    %29 = vector.shape_cast %28 : vector<2x8x8x32xbf16> to vector<128x32xbf16>
    %c0_54 = arith.constant 0 : index
    %c256 = arith.constant 256 : index
    %30 = vector.load %arg8[%c0_54, %c256] : memref<128x288xbf16, #tpu.memory_space<vmem>>, vector<128x32xbf16>
    tpu.vector_store %arg8[%c0_54, %c256], %29 {strides = array<i32>} : memref<128x288xbf16, #tpu.memory_space<vmem>>, vector<128x32xbf16>,
    %c0_55 = arith.constant 0 : index
    %c0_56 = arith.constant 0 : index
    %31 = vector.load %arg8[%c0_55, %c0_56] : memref<128x288xbf16, #tpu.memory_space<vmem>>, vector<128x288xbf16>
    %c0_57 = arith.constant 0 : index
    %c0_58 = arith.constant 0 : index
    %32 = vector.load %arg2[%c0_57, %c0_58] : memref<288x8xbf16, #tpu.memory_space<vmem>>, vector<288x8xbf16>
    %cst_59 = arith.constant dense<0.000000e+00> : vector<128x8xf32>
    %33 = tpu.matmul %31, %32, %cst_59 {dimension_numbers = #tpu.dot_dimension_numbers<[1], [0], [0], [1], [0, 0, 1, 1], [], []>} : vector<128x288xbf16>, vector<288x8xbf16>, vector<128x8xf32> -> vector<128x8xf32>
    %c0_60 = arith.constant 0 : index
    %c0_61 = arith.constant 0 : index
    %34 = vector.load %arg3[%c0_60, %c0_61] : memref<1x8xf32, #tpu.memory_space<vmem>>, vector<1x8xf32>
    %35 = vector.broadcast %34 : vector<1x8xf32> to vector<128x8xf32>
    %36 = arith.addf %33, %35 : vector<128x8xf32>
    %cst_62 = arith.constant 0.000000e+00 : f32
    %37 = vector.broadcast %cst_62 : f32 to vector<128x8xf32>
    %38 = arith.maximumf %36, %37 : vector<128x8xf32>
    %39 = arith.truncf %38 : vector<128x8xf32> to vector<128x8xbf16>
    %c0_63 = arith.constant 0 : index
    %c0_64 = arith.constant 0 : index
    %40 = vector.load %arg4[%c0_63, %c0_64] : memref<8x16xbf16, #tpu.memory_space<vmem>>, vector<8x16xbf16>
    %cst_65 = arith.constant dense<0.000000e+00> : vector<128x16xf32>
    %41 = tpu.matmul %39, %40, %cst_65 {dimension_numbers = #tpu.dot_dimension_numbers<[1], [0], [0], [1], [0, 0, 1, 1], [], []>} : vector<128x8xbf16>, vector<8x16xbf16>, vector<128x16xf32> -> vector<128x16xf32>
    %c0_66 = arith.constant 0 : index
    %c0_67 = arith.constant 0 : index
    %42 = vector.load %arg5[%c0_66, %c0_67] : memref<1x16xf32, #tpu.memory_space<vmem>>, vector<1x16xf32>
    %43 = vector.broadcast %42 : vector<1x16xf32> to vector<128x16xf32>
    %44 = arith.addf %41, %43 : vector<128x16xf32>
    %cst_68 = arith.constant dense<0xFF800000> : vector<128xf32>
    %45 = vector.multi_reduction <maximumf>, %44, %cst_68 [1] : vector<128x16xf32> to vector<128xf32>
    %46 = vector.shape_cast %45 : vector<128xf32> to vector<128x1xf32>
    %47 = vector.broadcast %46 : vector<128x1xf32> to vector<128x16xf32>
    %48 = arith.subf %44, %47 : vector<128x16xf32>
    %49 = math.exp %48 : vector<128x16xf32>
    %cst_69 = arith.constant dense<0.000000e+00> : vector<128xf32>
    %50 = vector.multi_reduction <add>, %49, %cst_69 [1] : vector<128x16xf32> to vector<128xf32>
    %51 = vector.shape_cast %50 : vector<128xf32> to vector<128x1xf32>
    %52 = math.log %51 : vector<128x1xf32>
    %53 = vector.broadcast %52 : vector<128x1xf32> to vector<128x16xf32>
    %54 = arith.subf %48, %53 : vector<128x16xf32>
    %55 = vector.shape_cast %54 : vector<128x16xf32> to vector<2x64x16xf32>
    %c0_70 = arith.constant 0 : index
    %c0_71 = arith.constant 0 : index
    %c0_72 = arith.constant 0 : index
    %56 = vector.load %arg6[%c0_70, %c0_71, %c0_72] : memref<2x64x16xf32, #tpu.memory_space<vmem>>, vector<2x64x16xf32>
    tpu.vector_store %arg6[%c0_70, %c0_71, %c0_72], %55 {strides = array<i32>} : memref<2x64x16xf32, #tpu.memory_space<vmem>>, vector<2x64x16xf32>,
    return
  }
  func.func @transform_0(%arg0: i32) -> (i32, i32, i32, i32) {
    %c0_i32 = arith.constant 0 : i32
    %c0_i32_0 = arith.constant 0 : i32
    %c0_i32_1 = arith.constant 0 : i32
    %c0_i32_2 = arith.constant 0 : i32
    return %arg0, %c0_i32, %c0_i32_0, %c0_i32_1 : i32, i32, i32, i32
  }
  func.func @transform_1(%arg0: i32) -> (i32, i32) {
    %c0_i32 = arith.constant 0 : i32
    %c0_i32_0 = arith.constant 0 : i32
    %c0_i32_1 = arith.constant 0 : i32
    return %c0_i32, %c0_i32_0 : i32, i32
  }
  func.func @transform_2(%arg0: i32) -> (i32, i32) {
    %c0_i32 = arith.constant 0 : i32
    %c0_i32_0 = arith.constant 0 : i32
    %c0_i32_1 = arith.constant 0 : i32
    return %c0_i32, %c0_i32_0 : i32, i32
  }
  func.func @transform_3(%arg0: i32) -> (i32, i32) {
    %c0_i32 = arith.constant 0 : i32
    %c0_i32_0 = arith.constant 0 : i32
    %c0_i32_1 = arith.constant 0 : i32
    return %c0_i32, %c0_i32_0 : i32, i32
  }
  func.func @transform_4(%arg0: i32) -> (i32, i32) {
    %c0_i32 = arith.constant 0 : i32
    %c0_i32_0 = arith.constant 0 : i32
    %c0_i32_1 = arith.constant 0 : i32
    return %c0_i32, %c0_i32_0 : i32, i32
  }
  func.func @transform_5(%arg0: i32) -> (i32, i32, i32) {
    %c0_i32 = arith.constant 0 : i32
    %c0_i32_0 = arith.constant 0 : i32
    %c0_i32_1 = arith.constant 0 : i32
    return %arg0, %c0_i32, %c0_i32_0 : i32, i32, i32
  }
}

</mosaic_0001>

<llo_original>
// kernel: tpu_custom_call.1
$region0: #{tpu_custom_call.1}
  #allocation0 [shape = 'u32[]', space=smem, size = 0x4, offset = 0x4, fixed_abs, tag = 'smem constant byte address 0x4 - core index']
  #allocation1 [shape = 'u32[144,128]{1,0:T(1,128)}', space=vmem, size = 0x12000, scoped, tag = 'internal scratch']
  #allocation2 [shape = 'bf16[2,10,10,32]{3,2,1,0:T(8,128)(2,1)}', space=vmem, size = 0x14000, scoped, tag = 'scratch operand']
  #allocation3 [shape = 'bf16[128,288]{1,0:T(8,128)(2,1)}', space=vmem, size = 0x18000, scoped, tag = 'scratch operand']
  %s0 = inlined_call_operand.vmem [shape: bf16[2,8,8,32], index: 0, kind: input, shape index: {}]
  %s1 = inlined_call_operand.vmem [shape: bf16[288,8], index: 1, kind: input, shape index: {}]
  %s2 = inlined_call_operand.vmem [shape: f32[1,8], index: 2, kind: input, shape index: {}]
  %s3 = inlined_call_operand.vmem [shape: bf16[8,16], index: 3, kind: input, shape index: {}]
  %s4 = inlined_call_operand.vmem [shape: f32[1,16], index: 4, kind: input, shape index: {}]
  %s5 = inlined_call_operand.vmem [shape: f32[2,64,16], index: 5, kind: output, shape index: {}]
  %s6 = sld [smem:[#allocation0]]
  $region30: #{tpu_custom_call.1} parent=0
    _
  %s8 = ssub.s32 1, %s6
  %s9 = scalar_select 0, %s8, %s6
  // Predicated region
  $region2: #{tpu_custom_call.1} parent=0 // pred_check
    _
  $region3: #{tpu_custom_call.1} parent=0 // pred_check_branch
    %11 = sbr.rel (0) target = $region5
  $region4: #{tpu_custom_call.1} parent=0 // pred_region
    _
  $region5: #{tpu_custom_call.1} parent=0 // pred_fallthru
    _
  // Predicated region
  $region6: #{tpu_custom_call.1} parent=0 // pred_check
    _
  $region7: #{tpu_custom_call.1} parent=0 // pred_check_branch
    %13 = sbr.rel (0) target = $region9
  $region8: #{tpu_custom_call.1} parent=0 // pred_region
    _
  $region9: #{tpu_custom_call.1} parent=0 // pred_fallthru
    _
  // Predicated region
  $region10: #{tpu_custom_call.1} parent=0 // pred_check
    _
  $region11: #{tpu_custom_call.1} parent=0 // pred_check_branch
    %15 = sbr.rel (0) target = $region13
  $region12: #{tpu_custom_call.1} parent=0 // pred_region
    _
  $region13: #{tpu_custom_call.1} parent=0 // pred_fallthru
    _
  // Predicated region
  $region14: #{tpu_custom_call.1} parent=0 // pred_check
    _
  $region15: #{tpu_custom_call.1} parent=0 // pred_check_branch
    %17 = sbr.rel (0) target = $region17
  $region16: #{tpu_custom_call.1} parent=0 // pred_region
    _
  $region17: #{tpu_custom_call.1} parent=0 // pred_fallthru
    _
  // Predicated region
  $region18: #{tpu_custom_call.1} parent=0 // pred_check
    _
  $region19: #{tpu_custom_call.1} parent=0 // pred_check_branch
    %19 = sbr.rel (0) target = $region21
  $region20: #{tpu_custom_call.1} parent=0 // pred_region
    _
  $region21: #{tpu_custom_call.1} parent=0 // pred_fallthru
    _
  %vm21 = vcmask 257024
  %22 = vst.msk [vmem:[#allocation2] sm:$0xf] %vm21, 0
  %vm23 = vcmask 253952
  %24 = vst.msk [vmem:[#allocation2 + $0x4] sm:$0x1] %vm23, 0
  %25 = vst.msk [vmem:[#allocation2 + $0x8] sm:$0xf] %vm21, 0
  %26 = vst.msk [vmem:[#allocation2 + $0xc] sm:$0x1] %vm23, 0
  %27 = vst.msk [vmem:[#allocation2 + $0x10] sm:$0xf] %vm21, 0
  %28 = vst.msk [vmem:[#allocation2 + $0x14] sm:$0x1] %vm23, 0
  %29 = vst.msk [vmem:[#allocation2 + $0x18] sm:$0xf] %vm21, 0
  %30 = vst.msk [vmem:[#allocation2 + $0x1c] sm:$0x1] %vm23, 0
  %31 = vst.msk [vmem:[#allocation2 + $0x20] sm:$0xf] %vm21, 0
  %32 = vst.msk [vmem:[#allocation2 + $0x24] sm:$0x1] %vm23, 0
  %33 = vst.msk [vmem:[#allocation2 + $0x28] sm:$0xf] %vm21, 0
  %34 = vst.msk [vmem:[#allocation2 + $0x2c] sm:$0x1] %vm23, 0
  %35 = vst.msk [vmem:[#allocation2 + $0x30] sm:$0xf] %vm21, 0
  %36 = vst.msk [vmem:[#allocation2 + $0x34] sm:$0x1] %vm23, 0
  %37 = vst.msk [vmem:[#allocation2 + $0x38] sm:$0xf] %vm21, 0
  %38 = vst.msk [vmem:[#allocation2 + $0x3c] sm:$0x1] %vm23, 0
  %39 = vst.msk [vmem:[#allocation2 + $0x40] sm:$0xf] %vm21, 0
  %40 = vst.msk [vmem:[#allocation2 + $0x44] sm:$0x1] %vm23, 0
  %41 = vst.msk [vmem:[#allocation2 + $0x48] sm:$0xf] %vm21, 0
  %42 = vst.msk [vmem:[#allocation2 + $0x4c] sm:$0x1] %vm23, 0
  %43 = vst.msk [vmem:[#allocation2 + $0x50] sm:$0xf] %vm21, 0
  %44 = vst.msk [vmem:[#allocation2 + $0x54] sm:$0x1] %vm23, 0
  %45 = vst.msk [vmem:[#allocation2 + $0x58] sm:$0xf] %vm21, 0
  %46 = vst.msk [vmem:[#allocation2 + $0x5c] sm:$0x1] %vm23, 0
  %47 = vst.msk [vmem:[#allocation2 + $0x60] sm:$0xf] %vm21, 0
  %48 = vst.msk [vmem:[#allocation2 + $0x64] sm:$0x1] %vm23, 0
  %49 = vst.msk [vmem:[#allocation2 + $0x68] sm:$0xf] %vm21, 0
  %50 = vst.msk [vmem:[#allocation2 + $0x6c] sm:$0x1] %vm23, 0
  %51 = vst.msk [vmem:[#allocation2 + $0x70] sm:$0xf] %vm21, 0
  %52 = vst.msk [vmem:[#allocation2 + $0x74] sm:$0x1] %vm23, 0
  %53 = vst.msk [vmem:[#allocation2 + $0x78] sm:$0xf] %vm21, 0
  %54 = vst.msk [vmem:[#allocation2 + $0x7c] sm:$0x1] %vm23, 0
  %55 = vst.msk [vmem:[#allocation2 + $0x80] sm:$0xf] %vm21, 0
  %56 = vst.msk [vmem:[#allocation2 + $0x84] sm:$0x1] %vm23, 0
  %57 = vst.msk [vmem:[#allocation2 + $0x88] sm:$0xf] %vm21, 0
  %58 = vst.msk [vmem:[#allocation2 + $0x8c] sm:$0x1] %vm23, 0
  %59 = vst.msk [vmem:[#allocation2 + $0x90] sm:$0xf] %vm21, 0
  %60 = vst.msk [vmem:[#allocation2 + $0x94] sm:$0x1] %vm23, 0
  %61 = vst.msk [vmem:[#allocation2 + $0x98] sm:$0xf] %vm21, 0
  %62 = vst.msk [vmem:[#allocation2 + $0x9c] sm:$0x1] %vm23, 0
  %v63 = vld [vmem:[%s0] sm:$0xf]
  %v64 = vld [vmem:[%s0 + $0x4] sm:$0xf]
  %v65 = vld [vmem:[%s0 + $0x8] sm:$0xf]
  %v66 = vld [vmem:[%s0 + $0xc] sm:$0xf]
  %v67 = vld [vmem:[%s0 + $0x10] sm:$0xf]
  %v68 = vld [vmem:[%s0 + $0x14] sm:$0xf]
  %v69 = vld [vmem:[%s0 + $0x18] sm:$0xf]
  %v70 = vld [vmem:[%s0 + $0x1c] sm:$0xf]
  %v71 = vld [vmem:[%s0 + $0x20] sm:$0xf]
  %v72 = vld [vmem:[%s0 + $0x24] sm:$0xf]
  %v73 = vld [vmem:[%s0 + $0x28] sm:$0xf]
  %v74 = vld [vmem:[%s0 + $0x2c] sm:$0xf]
  %v75 = vld [vmem:[%s0 + $0x30] sm:$0xf]
  %v76 = vld [vmem:[%s0 + $0x34] sm:$0xf]
  %v77 = vld [vmem:[%s0 + $0x38] sm:$0xf]
  %v78 = vld [vmem:[%s0 + $0x3c] sm:$0xf]
  %v80 = vshrl.u32 %v63, 16
  %v82 = vrot.slane %v80, 7
  %v83 = vshll.u32 %v63, 16
  %v85 = vor.u32 %v82, %v83
  %v86 = vrot.slane %v82, 4
  %v88 = vshrl.u32 %v64, 16
  %v90 = vrot.slane %v88, 7
  %v91 = vshll.u32 %v64, 16
  %v93 = vor.u32 %v90, %v91
  %v94 = vrot.slane %v90, 4
  %v96 = vshrl.u32 %v65, 16
  %v98 = vrot.slane %v96, 7
  %v99 = vshll.u32 %v65, 16
  %v101 = vor.u32 %v98, %v99
  %v102 = vrot.slane %v98, 4
  %v104 = vshrl.u32 %v66, 16
  %v106 = vrot.slane %v104, 7
  %v107 = vshll.u32 %v66, 16
  %v109 = vor.u32 %v106, %v107
  %v110 = vrot.slane %v106, 4
  %v112 = vshrl.u32 %v67, 16
  %v114 = vrot.slane %v112, 7
  %v115 = vshll.u32 %v67, 16
  %v117 = vor.u32 %v114, %v115
  %v118 = vrot.slane %v114, 4
  %v120 = vshrl.u32 %v68, 16
  %v122 = vrot.slane %v120, 7
  %v123 = vshll.u32 %v68, 16
  %v125 = vor.u32 %v122, %v123
  %v126 = vrot.slane %v122, 4
  %v128 = vshrl.u32 %v69, 16
  %v130 = vrot.slane %v128, 7
  %v131 = vshll.u32 %v69, 16
  %v133 = vor.u32 %v130, %v131
  %v134 = vrot.slane %v130, 4
  %v136 = vshrl.u32 %v70, 16
  %v138 = vrot.slane %v136, 7
  %v139 = vshll.u32 %v70, 16
  %v141 = vor.u32 %v138, %v139
  %v142 = vrot.slane %v138, 4
  %v144 = vshrl.u32 %v71, 16
  %v146 = vrot.slane %v144, 7
  %v147 = vshll.u32 %v71, 16
  %v149 = vor.u32 %v146, %v147
  %v150 = vrot.slane %v146, 4
  %v152 = vshrl.u32 %v72, 16
  %v154 = vrot.slane %v152, 7
  %v155 = vshll.u32 %v72, 16
  %v157 = vor.u32 %v154, %v155
  %v158 = vrot.slane %v154, 4
  %v160 = vshrl.u32 %v73, 16
  %v162 = vrot.slane %v160, 7
  %v163 = vshll.u32 %v73, 16
  %v165 = vor.u32 %v162, %v163
  %v166 = vrot.slane %v162, 4
  %v168 = vshrl.u32 %v74, 16
  %v170 = vrot.slane %v168, 7
  %v171 = vshll.u32 %v74, 16
  %v173 = vor.u32 %v170, %v171
  %v174 = vrot.slane %v170, 4
  %v176 = vshrl.u32 %v75, 16
  %v178 = vrot.slane %v176, 7
  %v179 = vshll.u32 %v75, 16
  %v181 = vor.u32 %v178, %v179
  %v182 = vrot.slane %v178, 4
  %v184 = vshrl.u32 %v76, 16
  %v186 = vrot.slane %v184, 7
  %v187 = vshll.u32 %v76, 16
  %v189 = vor.u32 %v186, %v187
  %v190 = vrot.slane %v186, 4
  %v192 = vshrl.u32 %v77, 16
  %v194 = vrot.slane %v192, 7
  %v195 = vshll.u32 %v77, 16
  %v197 = vor.u32 %v194, %v195
  %v198 = vrot.slane %v194, 4
  %v200 = vshrl.u32 %v78, 16
  %v202 = vrot.slane %v200, 7
  %v203 = vshll.u32 %v78, 16
  %v205 = vor.u32 %v202, %v203
  %v206 = vrot.slane %v202, 4
  %s239 = scalar_lea.vmem [#allocation2], 8
  %vm240 = vcmask 257024
  %vm241 = vsmask.f32 7938
  %vm242 = vmand %vm240, %vm241
  %v243 = vld [vmem:[%s239] sm:$0xf]
  %v244 = vsel %vm242, %v85, %v243
  %245 = vst [vmem:[%s239] sm:$0xf] %v244
  %vm246 = vcmask 253952
  %vm247 = vsmask.f32 256
  %vm248 = vmand %vm246, %vm247
  %v249 = vld [vmem:[%s239 + $0x4] sm:$0x1]
  %v250 = vsel %vm248, %v86, %v249
  %251 = vst [vmem:[%s239 + $0x4] sm:$0x1] %v250
  %v252 = vld [vmem:[%s239 + $0x8] sm:$0xf]
  %v253 = vsel %vm242, %v93, %v252
  %254 = vst [vmem:[%s239 + $0x8] sm:$0xf] %v253
  %v255 = vld [vmem:[%s239 + $0xc] sm:$0x1]
  %v256 = vsel %vm248, %v94, %v255
  %257 = vst [vmem:[%s239 + $0xc] sm:$0x1] %v256
  %v258 = vld [vmem:[%s239 + $0x10] sm:$0xf]
  %v259 = vsel %vm242, %v101, %v258
  %260 = vst [vmem:[%s239 + $0x10] sm:$0xf] %v259
  %v261 = vld [vmem:[%s239 + $0x14] sm:$0x1]
  %v262 = vsel %vm248, %v102, %v261
  %263 = vst [vmem:[%s239 + $0x14] sm:$0x1] %v262
  %v264 = vld [vmem:[%s239 + $0x18] sm:$0xf]
  %v265 = vsel %vm242, %v109, %v264
  %266 = vst [vmem:[%s239 + $0x18] sm:$0xf] %v265
  %v267 = vld [vmem:[%s239 + $0x1c] sm:$0x1]
  %v268 = vsel %vm248, %v110, %v267
  %269 = vst [vmem:[%s239 + $0x1c] sm:$0x1] %v268
  %v270 = vld [vmem:[%s239 + $0x20] sm:$0xf]
  %v271 = vsel %vm242, %v117, %v270
  %272 = vst [vmem:[%s239 + $0x20] sm:$0xf] %v271
  %v273 = vld [vmem:[%s239 + $0x24] sm:$0x1]
  %v274 = vsel %vm248, %v118, %v273
  %275 = vst [vmem:[%s239 + $0x24] sm:$0x1] %v274
  %v276 = vld [vmem:[%s239 + $0x28] sm:$0xf]
  %v277 = vsel %vm242, %v125, %v276
  %278 = vst [vmem:[%s239 + $0x28] sm:$0xf] %v277
  %v279 = vld [vmem:[%s239 + $0x2c] sm:$0x1]
  %v280 = vsel %vm248, %v126, %v279
  %281 = vst [vmem:[%s239 + $0x2c] sm:$0x1] %v280
  %v282 = vld [vmem:[%s239 + $0x30] sm:$0xf]
  %v283 = vsel %vm242, %v133, %v282
  %284 = vst [vmem:[%s239 + $0x30] sm:$0xf] %v283
  %v285 = vld [vmem:[%s239 + $0x34] sm:$0x1]
  %v286 = vsel %vm248, %v134, %v285
  %287 = vst [vmem:[%s239 + $0x34] sm:$0x1] %v286
  %v288 = vld [vmem:[%s239 + $0x38] sm:$0xf]
  %v289 = vsel %vm242, %v141, %v288
  %290 = vst [vmem:[%s239 + $0x38] sm:$0xf] %v289
  %v291 = vld [vmem:[%s239 + $0x3c] sm:$0x1]
  %v292 = vsel %vm248, %v142, %v291
  %293 = vst [vmem:[%s239 + $0x3c] sm:$0x1] %v292
  %v294 = vld [vmem:[%s239 + $0x50] sm:$0xf]
  %v295 = vsel %vm242, %v149, %v294
  %296 = vst [vmem:[%s239 + $0x50] sm:$0xf] %v295
  %v297 = vld [vmem:[%s239 + $0x54] sm:$0x1]
  %v298 = vsel %vm248, %v150, %v297
  %299 = vst [vmem:[%s239 + $0x54] sm:$0x1] %v298
  %v300 = vld [vmem:[%s239 + $0x58] sm:$0xf]
  %v301 = vsel %vm242, %v157, %v300
  %302 = vst [vmem:[%s239 + $0x58] sm:$0xf] %v301
  %v303 = vld [vmem:[%s239 + $0x5c] sm:$0x1]
  %v304 = vsel %vm248, %v158, %v303
  %305 = vst [vmem:[%s239 + $0x5c] sm:$0x1] %v304
  %v306 = vld [vmem:[%s239 + $0x60] sm:$0xf]
  %v307 = vsel %vm242, %v165, %v306
  %308 = vst [vmem:[%s239 + $0x60] sm:$0xf] %v307
  %v309 = vld [vmem:[%s239 + $0x64] sm:$0x1]
  %v310 = vsel %vm248, %v166, %v309
  %311 = vst [vmem:[%s239 + $0x64] sm:$0x1] %v310
  %v312 = vld [vmem:[%s239 + $0x68] sm:$0xf]
  %v313 = vsel %vm242, %v173, %v312
  %314 = vst [vmem:[%s239 + $0x68] sm:$0xf] %v313
  %v315 = vld [vmem:[%s239 + $0x6c] sm:$0x1]
  %v316 = vsel %vm248, %v174, %v315
  %317 = vst [vmem:[%s239 + $0x6c] sm:$0x1] %v316
  %v318 = vld [vmem:[%s239 + $0x70] sm:$0xf]
  %v319 = vsel %vm242, %v181, %v318
  %320 = vst [vmem:[%s239 + $0x70] sm:$0xf] %v319
  %v321 = vld [vmem:[%s239 + $0x74] sm:$0x1]
  %v322 = vsel %vm248, %v182, %v321
  %323 = vst [vmem:[%s239 + $0x74] sm:$0x1] %v322
  %v324 = vld [vmem:[%s239 + $0x78] sm:$0xf]
  %v325 = vsel %vm242, %v189, %v324
  %326 = vst [vmem:[%s239 + $0x78] sm:$0xf] %v325
  %v327 = vld [vmem:[%s239 + $0x7c] sm:$0x1]
  %v328 = vsel %vm248, %v190, %v327
  %329 = vst [vmem:[%s239 + $0x7c] sm:$0x1] %v328
  %v330 = vld [vmem:[%s239 + $0x80] sm:$0xf]
  %v331 = vsel %vm242, %v197, %v330
  %332 = vst [vmem:[%s239 + $0x80] sm:$0xf] %v331
  %v333 = vld [vmem:[%s239 + $0x84] sm:$0x1]
  %v334 = vsel %vm248, %v198, %v333
  %335 = vst [vmem:[%s239 + $0x84] sm:$0x1] %v334
  %v336 = vld [vmem:[%s239 + $0x88] sm:$0xf]
  %v337 = vsel %vm242, %v205, %v336
  %338 = vst [vmem:[%s239 + $0x88] sm:$0xf] %v337
  %v339 = vld [vmem:[%s239 + $0x8c] sm:$0x1]
  %v340 = vsel %vm248, %v206, %v339
  %341 = vst [vmem:[%s239 + $0x8c] sm:$0x1] %v340
  %v342 = vld [vmem:[#allocation2] sm:$0xf]
  %v343 = vld [vmem:[#allocation2 + $0x8] sm:$0xf]
  %v344 = vld [vmem:[#allocation2 + $0x10] sm:$0xf]
  %v345 = vld [vmem:[#allocation2 + $0x18] sm:$0xf]
  %v346 = vld [vmem:[#allocation2 + $0x20] sm:$0xf]
  %v347 = vld [vmem:[#allocation2 + $0x28] sm:$0xf]
  %v348 = vld [vmem:[#allocation2 + $0x30] sm:$0xf]
  %v349 = vld [vmem:[#allocation2 + $0x38] sm:$0xf]
  %v350 = vld [vmem:[#allocation2 + $0x50] sm:$0xf]
  %v351 = vld [vmem:[#allocation2 + $0x58] sm:$0xf]
  %v352 = vld [vmem:[#allocation2 + $0x60] sm:$0xf]
  %v353 = vld [vmem:[#allocation2 + $0x68] sm:$0xf]
  %v354 = vld [vmem:[#allocation2 + $0x70] sm:$0xf]
  %v355 = vld [vmem:[#allocation2 + $0x78] sm:$0xf]
  %v356 = vld [vmem:[#allocation2 + $0x80] sm:$0xf]
  %v357 = vld [vmem:[#allocation2 + $0x88] sm:$0xf]
  %358 = vst.msk [vmem:[#allocation3] sm:$0xf] %vm21, %v342
  %359 = vst.msk [vmem:[#allocation3 + $0xc] sm:$0xf] %vm21, %v343
  %360 = vst.msk [vmem:[#allocation3 + $0x18] sm:$0xf] %vm21, %v344
  %361 = vst.msk [vmem:[#allocation3 + $0x24] sm:$0xf] %vm21, %v345
  %362 = vst.msk [vmem:[#allocation3 + $0x30] sm:$0xf] %vm21, %v346
  %363 = vst.msk [vmem:[#allocation3 + $0x3c] sm:$0xf] %vm21, %v347
  %364 = vst.msk [vmem:[#allocation3 + $0x48] sm:$0xf] %vm21, %v348
  %365 = vst.msk [vmem:[#allocation3 + $0x54] sm:$0xf] %vm21, %v349
  %366 = vst.msk [vmem:[#allocation3 + $0x60] sm:$0xf] %vm21, %v350
  %367 = vst.msk [vmem:[#allocation3 + $0x6c] sm:$0xf] %vm21, %v351
  %368 = vst.msk [vmem:[#allocation3 + $0x78] sm:$0xf] %vm21, %v352
  %369 = vst.msk [vmem:[#allocation3 + $0x84] sm:$0xf] %vm21, %v353
  %370 = vst.msk [vmem:[#allocation3 + $0x90] sm:$0xf] %vm21, %v354
  %371 = vst.msk [vmem:[#allocation3 + $0x9c] sm:$0xf] %vm21, %v355
  %372 = vst.msk [vmem:[#allocation3 + $0xa8] sm:$0xf] %vm21, %v356
  %373 = vst.msk [vmem:[#allocation3 + $0xb4] sm:$0xf] %vm21, %v357
  %v374 = vld [vmem:[#allocation2] sm:$0xf]
  %v375 = vld [vmem:[#allocation2 + $0x4] sm:$0x1]
  %v376 = vld [vmem:[#allocation2 + $0x8] sm:$0xf]
  %v377 = vld [vmem:[#allocation2 + $0xc] sm:$0x1]
  %v378 = vld [vmem:[#allocation2 + $0x10] sm:$0xf]
  %v379 = vld [vmem:[#allocation2 + $0x14] sm:$0x1]
  %v380 = vld [vmem:[#allocation2 + $0x18] sm:$0xf]
  %v381 = vld [vmem:[#allocation2 + $0x1c] sm:$0x1]
  %v382 = vld [vmem:[#allocation2 + $0x20] sm:$0xf]
  %v383 = vld [vmem:[#allocation2 + $0x24] sm:$0x1]
  %v384 = vld [vmem:[#allocation2 + $0x28] sm:$0xf]
  %v385 = vld [vmem:[#allocation2 + $0x2c] sm:$0x1]
  %v386 = vld [vmem:[#allocation2 + $0x30] sm:$0xf]
  %v387 = vld [vmem:[#allocation2 + $0x34] sm:$0x1]
  %v388 = vld [vmem:[#allocation2 + $0x38] sm:$0xf]
  %v389 = vld [vmem:[#allocation2 + $0x3c] sm:$0x1]
  %v390 = vld [vmem:[#allocation2 + $0x50] sm:$0xf]
  %v391 = vld [vmem:[#allocation2 + $0x54] sm:$0x1]
  %v392 = vld [vmem:[#allocation2 + $0x58] sm:$0xf]
  %v393 = vld [vmem:[#allocation2 + $0x5c] sm:$0x1]
  %v394 = vld [vmem:[#allocation2 + $0x60] sm:$0xf]
  %v395 = vld [vmem:[#allocation2 + $0x64] sm:$0x1]
  %v396 = vld [vmem:[#allocation2 + $0x68] sm:$0xf]
  %v397 = vld [vmem:[#allocation2 + $0x6c] sm:$0x1]
  %v398 = vld [vmem:[#allocation2 + $0x70] sm:$0xf]
  %v399 = vld [vmem:[#allocation2 + $0x74] sm:$0x1]
  %v400 = vld [vmem:[#allocation2 + $0x78] sm:$0xf]
  %v401 = vld [vmem:[#allocation2 + $0x7c] sm:$0x1]
  %v402 = vld [vmem:[#allocation2 + $0x80] sm:$0xf]
  %v403 = vld [vmem:[#allocation2 + $0x84] sm:$0x1]
  %v404 = vld [vmem:[#allocation2 + $0x88] sm:$0xf]
  %v405 = vld [vmem:[#allocation2 + $0x8c] sm:$0x1]
  %vm406 = vsmask.f32 3328
  %vm407 = vsmask.f32 7440
  %vm408 = vmor %vm406, %vm407
  %v410 = vshrl.u32 %v374, 16
  %v412 = vrot.slane %v410, 4
  %v413 = vshll.u32 %v374, 16
  %v415 = vrot.slane %v413, 5
  %v416 = vor.u32 %v412, %v415
  %v417 = vrot.slane %v416, 4
  %v419 = vshll.u32 %v375, 16
  %v421 = vrot.slane %v419, 5
  %v422 = vsel %vm408, %v417, %v421
  %v424 = vshrl.u32 %v376, 16
  %v426 = vrot.slane %v424, 4
  %v427 = vshll.u32 %v376, 16
  %v429 = vrot.slane %v427, 5
  %v430 = vor.u32 %v426, %v429
  %v431 = vrot.slane %v430, 4
  %v433 = vshll.u32 %v377, 16
  %v435 = vrot.slane %v433, 5
  %v436 = vsel %vm408, %v431, %v435
  %v438 = vshrl.u32 %v378, 16
  %v440 = vrot.slane %v438, 4
  %v441 = vshll.u32 %v378, 16
  %v443 = vrot.slane %v441, 5
  %v444 = vor.u32 %v440, %v443
  %v445 = vrot.slane %v444, 4
  %v447 = vshll.u32 %v379, 16
  %v449 = vrot.slane %v447, 5
  %v450 = vsel %vm408, %v445, %v449
  %v452 = vshrl.u32 %v380, 16
  %v454 = vrot.slane %v452, 4
  %v455 = vshll.u32 %v380, 16
  %v457 = vrot.slane %v455, 5
  %v458 = vor.u32 %v454, %v457
  %v459 = vrot.slane %v458, 4
  %v461 = vshll.u32 %v381, 16
  %v463 = vrot.slane %v461, 5
  %v464 = vsel %vm408, %v459, %v463
  %v466 = vshrl.u32 %v382, 16
  %v468 = vrot.slane %v466, 4
  %v469 = vshll.u32 %v382, 16
  %v471 = vrot.slane %v469, 5
  %v472 = vor.u32 %v468, %v471
  %v473 = vrot.slane %v472, 4
  %v475 = vshll.u32 %v383, 16
  %v477 = vrot.slane %v475, 5
  %v478 = vsel %vm408, %v473, %v477
  %v480 = vshrl.u32 %v384, 16
  %v482 = vrot.slane %v480, 4
  %v483 = vshll.u32 %v384, 16
  %v485 = vrot.slane %v483, 5
  %v486 = vor.u32 %v482, %v485
  %v487 = vrot.slane %v486, 4
  %v489 = vshll.u32 %v385, 16
  %v491 = vrot.slane %v489, 5
  %v492 = vsel %vm408, %v487, %v491
  %v494 = vshrl.u32 %v386, 16
  %v496 = vrot.slane %v494, 4
  %v497 = vshll.u32 %v386, 16
  %v499 = vrot.slane %v497, 5
  %v500 = vor.u32 %v496, %v499
  %v501 = vrot.slane %v500, 4
  %v503 = vshll.u32 %v387, 16
  %v505 = vrot.slane %v503, 5
  %v506 = vsel %vm408, %v501, %v505
  %v508 = vshrl.u32 %v388, 16
  %v510 = vrot.slane %v508, 4
  %v511 = vshll.u32 %v388, 16
  %v513 = vrot.slane %v511, 5
  %v514 = vor.u32 %v510, %v513
  %v515 = vrot.slane %v514, 4
  %v517 = vshll.u32 %v389, 16
  %v519 = vrot.slane %v517, 5
  %v520 = vsel %vm408, %v515, %v519
  %v522 = vshrl.u32 %v390, 16
  %v524 = vrot.slane %v522, 4
  %v525 = vshll.u32 %v390, 16
  %v527 = vrot.slane %v525, 5
  %v528 = vor.u32 %v524, %v527
  %v529 = vrot.slane %v528, 4
  %v531 = vshll.u32 %v391, 16
  %v533 = vrot.slane %v531, 5
  %v534 = vsel %vm408, %v529, %v533
  %v536 = vshrl.u32 %v392, 16
  %v538 = vrot.slane %v536, 4
  %v539 = vshll.u32 %v392, 16
  %v541 = vrot.slane %v539, 5
  %v542 = vor.u32 %v538, %v541
  %v543 = vrot.slane %v542, 4
  %v545 = vshll.u32 %v393, 16
  %v547 = vrot.slane %v545, 5
  %v548 = vsel %vm408, %v543, %v547
  %v550 = vshrl.u32 %v394, 16
  %v552 = vrot.slane %v550, 4
  %v553 = vshll.u32 %v394, 16
  %v555 = vrot.slane %v553, 5
  %v556 = vor.u32 %v552, %v555
  %v557 = vrot.slane %v556, 4
  %v559 = vshll.u32 %v395, 16
  %v561 = vrot.slane %v559, 5
  %v562 = vsel %vm408, %v557, %v561
  %v564 = vshrl.u32 %v396, 16
  %v566 = vrot.slane %v564, 4
  %v567 = vshll.u32 %v396, 16
  %v569 = vrot.slane %v567, 5
  %v570 = vor.u32 %v566, %v569
  %v571 = vrot.slane %v570, 4
  %v573 = vshll.u32 %v397, 16
  %v575 = vrot.slane %v573, 5
  %v576 = vsel %vm408, %v571, %v575
  %v578 = vshrl.u32 %v398, 16
  %v580 = vrot.slane %v578, 4
  %v581 = vshll.u32 %v398, 16
  %v583 = vrot.slane %v581, 5
  %v584 = vor.u32 %v580, %v583
  %v585 = vrot.slane %v584, 4
  %v587 = vshll.u32 %v399, 16
  %v589 = vrot.slane %v587, 5
  %v590 = vsel %vm408, %v585, %v589
  %v592 = vshrl.u32 %v400, 16
  %v594 = vrot.slane %v592, 4
  %v595 = vshll.u32 %v400, 16
  %v597 = vrot.slane %v595, 5
  %v598 = vor.u32 %v594, %v597
  %v599 = vrot.slane %v598, 4
  %v601 = vshll.u32 %v401, 16
  %v603 = vrot.slane %v601, 5
  %v604 = vsel %vm408, %v599, %v603
  %v606 = vshrl.u32 %v402, 16
  %v608 = vrot.slane %v606, 4
  %v609 = vshll.u32 %v402, 16
  %v611 = vrot.slane %v609, 5
  %v612 = vor.u32 %v608, %v611
  %v613 = vrot.slane %v612, 4
  %v615 = vshll.u32 %v403, 16
  %v617 = vrot.slane %v615, 5
  %v618 = vsel %vm408, %v613, %v617
  %v620 = vshrl.u32 %v404, 16
  %v622 = vrot.slane %v620, 4
  %v623 = vshll.u32 %v404, 16
  %v625 = vrot.slane %v623, 5
  %v626 = vor.u32 %v622, %v625
  %v627 = vrot.slane %v626, 4
  %v629 = vshll.u32 %v405, 16
  %v631 = vrot.slane %v629, 5
  %v632 = vsel %vm408, %v627, %v631
  %633 = vrot.lane.b32.xlu0 %v422, 32
  %v634 = vpop.permute.xlu0 %633
  %635 = vrot.lane.b32.xlu0 %v436, 32
  %v636 = vpop.permute.xlu0 %635
  %637 = vrot.lane.b32.xlu0 %v450, 32
  %v638 = vpop.permute.xlu0 %637
  %639 = vrot.lane.b32.xlu0 %v464, 32
  %v640 = vpop.permute.xlu0 %639
  %641 = vrot.lane.b32.xlu0 %v478, 32
  %v642 = vpop.permute.xlu0 %641
  %643 = vrot.lane.b32.xlu0 %v492, 32
  %v644 = vpop.permute.xlu0 %643
  %645 = vrot.lane.b32.xlu0 %v506, 32
  %v646 = vpop.permute.xlu0 %645
  %647 = vrot.lane.b32.xlu0 %v520, 32
  %v648 = vpop.permute.xlu0 %647
  %649 = vrot.lane.b32.xlu0 %v534, 32
  %v650 = vpop.permute.xlu0 %649
  %651 = vrot.lane.b32.xlu0 %v548, 32
  %v652 = vpop.permute.xlu0 %651
  %653 = vrot.lane.b32.xlu0 %v562, 32
  %v654 = vpop.permute.xlu0 %653
  %655 = vrot.lane.b32.xlu0 %v576, 32
  %v656 = vpop.permute.xlu0 %655
  %657 = vrot.lane.b32.xlu0 %v590, 32
  %v658 = vpop.permute.xlu0 %657
  %659 = vrot.lane.b32.xlu0 %v604, 32
  %v660 = vpop.permute.xlu0 %659
  %661 = vrot.lane.b32.xlu0 %v618, 32
  %v662 = vpop.permute.xlu0 %661
  %663 = vrot.lane.b32.xlu0 %v632, 32
  %v664 = vpop.permute.xlu0 %663
  %vm681 = vcmask 519424
  %682 = vst.msk [vmem:[#allocation3] sm:$0xf] %vm681, %v634
  %683 = vst.msk [vmem:[#allocation3 + $0xc] sm:$0xf] %vm681, %v636
  %684 = vst.msk [vmem:[#allocation3 + $0x18] sm:$0xf] %vm681, %v638
  %685 = vst.msk [vmem:[#allocation3 + $0x24] sm:$0xf] %vm681, %v640
  %686 = vst.msk [vmem:[#allocation3 + $0x30] sm:$0xf] %vm681, %v642
  %687 = vst.msk [vmem:[#allocation3 + $0x3c] sm:$0xf] %vm681, %v644
  %688 = vst.msk [vmem:[#allocation3 + $0x48] sm:$0xf] %vm681, %v646
  %689 = vst.msk [vmem:[#allocation3 + $0x54] sm:$0xf] %vm681, %v648
  %690 = vst.msk [vmem:[#allocation3 + $0x60] sm:$0xf] %vm681, %v650
  %691 = vst.msk [vmem:[#allocation3 + $0x6c] sm:$0xf] %vm681, %v652
  %692 = vst.msk [vmem:[#allocation3 + $0x78] sm:$0xf] %vm681, %v654
  %693 = vst.msk [vmem:[#allocation3 + $0x84] sm:$0xf] %vm681, %v656
  %694 = vst.msk [vmem:[#allocation3 + $0x90] sm:$0xf] %vm681, %v658
  %695 = vst.msk [vmem:[#allocation3 + $0x9c] sm:$0xf] %vm681, %v660
  %696 = vst.msk [vmem:[#allocation3 + $0xa8] sm:$0xf] %vm681, %v662
  %697 = vst.msk [vmem:[#allocation3 + $0xb4] sm:$0xf] %vm681, %v664
  %v698 = vld [vmem:[#allocation2] sm:$0xe]
  %v699 = vld [vmem:[#allocation2 + $0x4] sm:$0x1]
  %v700 = vld [vmem:[#allocation2 + $0x8] sm:$0xe]
  %v701 = vld [vmem:[#allocation2 + $0xc] sm:$0x1]
  %v702 = vld [vmem:[#allocation2 + $0x10] sm:$0xe]
  %v703 = vld [vmem:[#allocation2 + $0x14] sm:$0x1]
  %v704 = vld [vmem:[#allocation2 + $0x18] sm:$0xe]
  %v705 = vld [vmem:[#allocation2 + $0x1c] sm:$0x1]
  %v706 = vld [vmem:[#allocation2 + $0x20] sm:$0xe]
  %v707 = vld [vmem:[#allocation2 + $0x24] sm:$0x1]
  %v708 = vld [vmem:[#allocation2 + $0x28] sm:$0xe]
  %v709 = vld [vmem:[#allocation2 + $0x2c] sm:$0x1]
  %v710 = vld [vmem:[#allocation2 + $0x30] sm:$0xe]
  %v711 = vld [vmem:[#allocation2 + $0x34] sm:$0x1]
  %v712 = vld [vmem:[#allocation2 + $0x38] sm:$0xe]
  %v713 = vld [vmem:[#allocation2 + $0x3c] sm:$0x1]
  %v714 = vld [vmem:[#allocation2 + $0x50] sm:$0xe]
  %v715 = vld [vmem:[#allocation2 + $0x54] sm:$0x1]
  %v716 = vld [vmem:[#allocation2 + $0x58] sm:$0xe]
  %v717 = vld [vmem:[#allocation2 + $0x5c] sm:$0x1]
  %v718 = vld [vmem:[#allocation2 + $0x60] sm:$0xe]
  %v719 = vld [vmem:[#allocation2 + $0x64] sm:$0x1]
  %v720 = vld [vmem:[#allocation2 + $0x68] sm:$0xe]
  %v721 = vld [vmem:[#allocation2 + $0x6c] sm:$0x1]
  %v722 = vld [vmem:[#allocation2 + $0x70] sm:$0xe]
  %v723 = vld [vmem:[#allocation2 + $0x74] sm:$0x1]
  %v724 = vld [vmem:[#allocation2 + $0x78] sm:$0xe]
  %v725 = vld [vmem:[#allocation2 + $0x7c] sm:$0x1]
  %v726 = vld [vmem:[#allocation2 + $0x80] sm:$0xe]
  %v727 = vld [vmem:[#allocation2 + $0x84] sm:$0x1]
  %v728 = vld [vmem:[#allocation2 + $0x88] sm:$0xe]
  %v729 = vld [vmem:[#allocation2 + $0x8c] sm:$0x1]
  %vm762 = vcmask 1042432
  %vm763 = vcmask 1046532
  %vm764 = vmor %vm762, %vm763
  %v765 = vrot.slane %v698, 5
  %v766 = vrot.slane %v765, 4
  %v767 = vrot.slane %v699, 5
  %v768 = vsel %vm764, %v766, %v767
  %v769 = vrot.slane %v700, 5
  %v770 = vrot.slane %v769, 4
  %v771 = vrot.slane %v701, 5
  %v772 = vsel %vm764, %v770, %v771
  %v773 = vrot.slane %v702, 5
  %v774 = vrot.slane %v773, 4
  %v775 = vrot.slane %v703, 5
  %v776 = vsel %vm764, %v774, %v775
  %v777 = vrot.slane %v704, 5
  %v778 = vrot.slane %v777, 4
  %v779 = vrot.slane %v705, 5
  %v780 = vsel %vm764, %v778, %v779
  %v781 = vrot.slane %v706, 5
  %v782 = vrot.slane %v781, 4
  %v783 = vrot.slane %v707, 5
  %v784 = vsel %vm764, %v782, %v783
  %v785 = vrot.slane %v708, 5
  %v786 = vrot.slane %v785, 4
  %v787 = vrot.slane %v709, 5
  %v788 = vsel %vm764, %v786, %v787
  %v789 = vrot.slane %v710, 5
  %v790 = vrot.slane %v789, 4
  %v791 = vrot.slane %v711, 5
  %v792 = vsel %vm764, %v790, %v791
  %v793 = vrot.slane %v712, 5
  %v794 = vrot.slane %v793, 4
  %v795 = vrot.slane %v713, 5
  %v796 = vsel %vm764, %v794, %v795
  %v797 = vrot.slane %v714, 5
  %v798 = vrot.slane %v797, 4
  %v799 = vrot.slane %v715, 5
  %v800 = vsel %vm764, %v798, %v799
  %v801 = vrot.slane %v716, 5
  %v802 = vrot.slane %v801, 4
  %v803 = vrot.slane %v717, 5
  %v804 = vsel %vm764, %v802, %v803
  %v805 = vrot.slane %v718, 5
  %v806 = vrot.slane %v805, 4
  %v807 = vrot.slane %v719, 5
  %v808 = vsel %vm764, %v806, %v807
  %v809 = vrot.slane %v720, 5
  %v810 = vrot.slane %v809, 4
  %v811 = vrot.slane %v721, 5
  %v812 = vsel %vm764, %v810, %v811
  %v813 = vrot.slane %v722, 5
  %v814 = vrot.slane %v813, 4
  %v815 = vrot.slane %v723, 5
  %v816 = vsel %vm764, %v814, %v815
  %v817 = vrot.slane %v724, 5
  %v818 = vrot.slane %v817, 4
  %v819 = vrot.slane %v725, 5
  %v820 = vsel %vm764, %v818, %v819
  %v821 = vrot.slane %v726, 5
  %v822 = vrot.slane %v821, 4
  %v823 = vrot.slane %v727, 5
  %v824 = vsel %vm764, %v822, %v823
  %v825 = vrot.slane %v728, 5
  %v826 = vrot.slane %v825, 4
  %v827 = vrot.slane %v729, 5
  %v828 = vsel %vm764, %v826, %v827
  %829 = vrot.lane.b32.xlu0 %v768, 64
  %v830 = vpop.permute.xlu0 %829
  %831 = vrot.lane.b32.xlu0 %v772, 64
  %v832 = vpop.permute.xlu0 %831
  %833 = vrot.lane.b32.xlu0 %v776, 64
  %v834 = vpop.permute.xlu0 %833
  %835 = vrot.lane.b32.xlu0 %v780, 64
  %v836 = vpop.permute.xlu0 %835
  %837 = vrot.lane.b32.xlu0 %v784, 64
  %v838 = vpop.permute.xlu0 %837
  %839 = vrot.lane.b32.xlu0 %v788, 64
  %v840 = vpop.permute.xlu0 %839
  %841 = vrot.lane.b32.xlu0 %v792, 64
  %v842 = vpop.permute.xlu0 %841
  %843 = vrot.lane.b32.xlu0 %v796, 64
  %v844 = vpop.permute.xlu0 %843
  %845 = vrot.lane.b32.xlu0 %v800, 64
  %v846 = vpop.permute.xlu0 %845
  %847 = vrot.lane.b32.xlu0 %v804, 64
  %v848 = vpop.permute.xlu0 %847
  %849 = vrot.lane.b32.xlu0 %v808, 64
  %v850 = vpop.permute.xlu0 %849
  %851 = vrot.lane.b32.xlu0 %v812, 64
  %v852 = vpop.permute.xlu0 %851
  %853 = vrot.lane.b32.xlu0 %v816, 64
  %v854 = vpop.permute.xlu0 %853
  %855 = vrot.lane.b32.xlu0 %v820, 64
  %v856 = vpop.permute.xlu0 %855
  %857 = vrot.lane.b32.xlu0 %v824, 64
  %v858 = vpop.permute.xlu0 %857
  %859 = vrot.lane.b32.xlu0 %v828, 64
  %v860 = vpop.permute.xlu0 %859
  %vm877 = vcmask 781824
  %878 = vst.msk [vmem:[#allocation3] sm:$0xf] %vm877, %v830
  %879 = vst.msk [vmem:[#allocation3 + $0xc] sm:$0xf] %vm877, %v832
  %880 = vst.msk [vmem:[#allocation3 + $0x18] sm:$0xf] %vm877, %v834
  %881 = vst.msk [vmem:[#allocation3 + $0x24] sm:$0xf] %vm877, %v836
  %882 = vst.msk [vmem:[#allocation3 + $0x30] sm:$0xf] %vm877, %v838
  %883 = vst.msk [vmem:[#allocation3 + $0x3c] sm:$0xf] %vm877, %v840
  %884 = vst.msk [vmem:[#allocation3 + $0x48] sm:$0xf] %vm877, %v842
  %885 = vst.msk [vmem:[#allocation3 + $0x54] sm:$0xf] %vm877, %v844
  %886 = vst.msk [vmem:[#allocation3 + $0x60] sm:$0xf] %vm877, %v846
  %887 = vst.msk [vmem:[#allocation3 + $0x6c] sm:$0xf] %vm877, %v848
  %888 = vst.msk [vmem:[#allocation3 + $0x78] sm:$0xf] %vm877, %v850
  %889 = vst.msk [vmem:[#allocation3 + $0x84] sm:$0xf] %vm877, %v852
  %890 = vst.msk [vmem:[#allocation3 + $0x90] sm:$0xf] %vm877, %v854
  %891 = vst.msk [vmem:[#allocation3 + $0x9c] sm:$0xf] %vm877, %v856
  %892 = vst.msk [vmem:[#allocation3 + $0xa8] sm:$0xf] %vm877, %v858
  %893 = vst.msk [vmem:[#allocation3 + $0xb4] sm:$0xf] %vm877, %v860
  %v894 = vld [vmem:[%s239] sm:$0xf]
  %v895 = vld [vmem:[%s239 + $0x8] sm:$0xf]
  %v896 = vld [vmem:[%s239 + $0x10] sm:$0xf]
  %v897 = vld [vmem:[%s239 + $0x18] sm:$0xf]
  %v898 = vld [vmem:[%s239 + $0x20] sm:$0xf]
  %v899 = vld [vmem:[%s239 + $0x28] sm:$0xf]
  %v900 = vld [vmem:[%s239 + $0x30] sm:$0xf]
  %v901 = vld [vmem:[%s239 + $0x38] sm:$0xf]
  %v902 = vld [vmem:[%s239 + $0x50] sm:$0xf]
  %v903 = vld [vmem:[%s239 + $0x58] sm:$0xf]
  %v904 = vld [vmem:[%s239 + $0x60] sm:$0xf]
  %v905 = vld [vmem:[%s239 + $0x68] sm:$0xf]
  %v906 = vld [vmem:[%s239 + $0x70] sm:$0xf]
  %v907 = vld [vmem:[%s239 + $0x78] sm:$0xf]
  %v908 = vld [vmem:[%s239 + $0x80] sm:$0xf]
  %v909 = vld [vmem:[%s239 + $0x88] sm:$0xf]
  %926 = vrot.lane.b32.xlu0 %v894, 96
  %v927 = vpop.permute.xlu0 %926
  %928 = vrot.lane.b32.xlu0 %v895, 96
  %v929 = vpop.permute.xlu0 %928
  %930 = vrot.lane.b32.xlu0 %v896, 96
  %v931 = vpop.permute.xlu0 %930
  %932 = vrot.lane.b32.xlu0 %v897, 96
  %v933 = vpop.permute.xlu0 %932
  %934 = vrot.lane.b32.xlu0 %v898, 96
  %v935 = vpop.permute.xlu0 %934
  %936 = vrot.lane.b32.xlu0 %v899, 96
  %v937 = vpop.permute.xlu0 %936
  %938 = vrot.lane.b32.xlu0 %v900, 96
  %v939 = vpop.permute.xlu0 %938
  %940 = vrot.lane.b32.xlu0 %v901, 96
  %v941 = vpop.permute.xlu0 %940
  %942 = vrot.lane.b32.xlu0 %v902, 96
  %v943 = vpop.permute.xlu0 %942
  %944 = vrot.lane.b32.xlu0 %v903, 96
  %v945 = vpop.permute.xlu0 %944
  %946 = vrot.lane.b32.xlu0 %v904, 96
  %v947 = vpop.permute.xlu0 %946
  %948 = vrot.lane.b32.xlu0 %v905, 96
  %v949 = vpop.permute.xlu0 %948
  %950 = vrot.lane.b32.xlu0 %v906, 96
  %v951 = vpop.permute.xlu0 %950
  %952 = vrot.lane.b32.xlu0 %v907, 96
  %v953 = vpop.permute.xlu0 %952
  %954 = vrot.lane.b32.xlu0 %v908, 96
  %v955 = vpop.permute.xlu0 %954
  %956 = vrot.lane.b32.xlu0 %v909, 96
  %v957 = vpop.permute.xlu0 %956
  %vm974 = vcmask 1044224
  %975 = vst.msk [vmem:[#allocation3] sm:$0xf] %vm974, %v927
  %976 = vst.msk [vmem:[#allocation3 + $0xc] sm:$0xf] %vm974, %v929
  %977 = vst.msk [vmem:[#allocation3 + $0x18] sm:$0xf] %vm974, %v931
  %978 = vst.msk [vmem:[#allocation3 + $0x24] sm:$0xf] %vm974, %v933
  %979 = vst.msk [vmem:[#allocation3 + $0x30] sm:$0xf] %vm974, %v935
  %980 = vst.msk [vmem:[#allocation3 + $0x3c] sm:$0xf] %vm974, %v937
  %981 = vst.msk [vmem:[#allocation3 + $0x48] sm:$0xf] %vm974, %v939
  %982 = vst.msk [vmem:[#allocation3 + $0x54] sm:$0xf] %vm974, %v941
  %983 = vst.msk [vmem:[#allocation3 + $0x60] sm:$0xf] %vm974, %v943
  %984 = vst.msk [vmem:[#allocation3 + $0x6c] sm:$0xf] %vm974, %v945
  %985 = vst.msk [vmem:[#allocation3 + $0x78] sm:$0xf] %vm974, %v947
  %986 = vst.msk [vmem:[#allocation3 + $0x84] sm:$0xf] %vm974, %v949
  %987 = vst.msk [vmem:[#allocation3 + $0x90] sm:$0xf] %vm974, %v951
  %988 = vst.msk [vmem:[#allocation3 + $0x9c] sm:$0xf] %vm974, %v953
  %989 = vst.msk [vmem:[#allocation3 + $0xa8] sm:$0xf] %vm974, %v955
  %990 = vst.msk [vmem:[#allocation3 + $0xb4] sm:$0xf] %vm974, %v957
  %v991 = vld [vmem:[%s239] sm:$0xf]
  %v992 = vld [vmem:[%s239 + $0x4] sm:$0x1]
  %v993 = vld [vmem:[%s239 + $0x8] sm:$0xf]
  %v994 = vld [vmem:[%s239 + $0xc] sm:$0x1]
  %v995 = vld [vmem:[%s239 + $0x10] sm:$0xf]
  %v996 = vld [vmem:[%s239 + $0x14] sm:$0x1]
  %v997 = vld [vmem:[%s239 + $0x18] sm:$0xf]
  %v998 = vld [vmem:[%s239 + $0x1c] sm:$0x1]
  %v999 = vld [vmem:[%s239 + $0x20] sm:$0xf]
  %v1000 = vld [vmem:[%s239 + $0x24] sm:$0x1]
  %v1001 = vld [vmem:[%s239 + $0x28] sm:$0xf]
  %v1002 = vld [vmem:[%s239 + $0x2c] sm:$0x1]
  %v1003 = vld [vmem:[%s239 + $0x30] sm:$0xf]
  %v1004 = vld [vmem:[%s239 + $0x34] sm:$0x1]
  %v1005 = vld [vmem:[%s239 + $0x38] sm:$0xf]
  %v1006 = vld [vmem:[%s239 + $0x3c] sm:$0x1]
  %v1007 = vld [vmem:[%s239 + $0x50] sm:$0xf]
  %v1008 = vld [vmem:[%s239 + $0x54] sm:$0x1]
  %v1009 = vld [vmem:[%s239 + $0x58] sm:$0xf]
  %v1010 = vld [vmem:[%s239 + $0x5c] sm:$0x1]
  %v1011 = vld [vmem:[%s239 + $0x60] sm:$0xf]
  %v1012 = vld [vmem:[%s239 + $0x64] sm:$0x1]
  %v1013 = vld [vmem:[%s239 + $0x68] sm:$0xf]
  %v1014 = vld [vmem:[%s239 + $0x6c] sm:$0x1]
  %v1015 = vld [vmem:[%s239 + $0x70] sm:$0xf]
  %v1016 = vld [vmem:[%s239 + $0x74] sm:$0x1]
  %v1017 = vld [vmem:[%s239 + $0x78] sm:$0xf]
  %v1018 = vld [vmem:[%s239 + $0x7c] sm:$0x1]
  %v1019 = vld [vmem:[%s239 + $0x80] sm:$0xf]
  %v1020 = vld [vmem:[%s239 + $0x84] sm:$0x1]
  %v1021 = vld [vmem:[%s239 + $0x88] sm:$0xf]
  %v1022 = vld [vmem:[%s239 + $0x8c] sm:$0x1]
  %v1024 = vshrl.u32 %v991, 16
  %v1026 = vrot.slane %v1024, 4
  %v1027 = vshll.u32 %v991, 16
  %v1029 = vrot.slane %v1027, 5
  %v1030 = vor.u32 %v1026, %v1029
  %v1031 = vrot.slane %v1030, 4
  %v1033 = vshll.u32 %v992, 16
  %v1035 = vrot.slane %v1033, 5
  %v1036 = vsel %vm408, %v1031, %v1035
  %v1038 = vshrl.u32 %v993, 16
  %v1040 = vrot.slane %v1038, 4
  %v1041 = vshll.u32 %v993, 16
  %v1043 = vrot.slane %v1041, 5
  %v1044 = vor.u32 %v1040, %v1043
  %v1045 = vrot.slane %v1044, 4
  %v1047 = vshll.u32 %v994, 16
  %v1049 = vrot.slane %v1047, 5
  %v1050 = vsel %vm408, %v1045, %v1049
  %v1052 = vshrl.u32 %v995, 16
  %v1054 = vrot.slane %v1052, 4
  %v1055 = vshll.u32 %v995, 16
  %v1057 = vrot.slane %v1055, 5
  %v1058 = vor.u32 %v1054, %v1057
  %v1059 = vrot.slane %v1058, 4
  %v1061 = vshll.u32 %v996, 16
  %v1063 = vrot.slane %v1061, 5
  %v1064 = vsel %vm408, %v1059, %v1063
  %v1066 = vshrl.u32 %v997, 16
  %v1068 = vrot.slane %v1066, 4
  %v1069 = vshll.u32 %v997, 16
  %v1071 = vrot.slane %v1069, 5
  %v1072 = vor.u32 %v1068, %v1071
  %v1073 = vrot.slane %v1072, 4
  %v1075 = vshll.u32 %v998, 16
  %v1077 = vrot.slane %v1075, 5
  %v1078 = vsel %vm408, %v1073, %v1077
  %v1080 = vshrl.u32 %v999, 16
  %v1082 = vrot.slane %v1080, 4
  %v1083 = vshll.u32 %v999, 16
  %v1085 = vrot.slane %v1083, 5
  %v1086 = vor.u32 %v1082, %v1085
  %v1087 = vrot.slane %v1086, 4
  %v1089 = vshll.u32 %v1000, 16
  %v1091 = vrot.slane %v1089, 5
  %v1092 = vsel %vm408, %v1087, %v1091
  %v1094 = vshrl.u32 %v1001, 16
  %v1096 = vrot.slane %v1094, 4
  %v1097 = vshll.u32 %v1001, 16
  %v1099 = vrot.slane %v1097, 5
  %v1100 = vor.u32 %v1096, %v1099
  %v1101 = vrot.slane %v1100, 4
  %v1103 = vshll.u32 %v1002, 16
  %v1105 = vrot.slane %v1103, 5
  %v1106 = vsel %vm408, %v1101, %v1105
  %v1108 = vshrl.u32 %v1003, 16
  %v1110 = vrot.slane %v1108, 4
  %v1111 = vshll.u32 %v1003, 16
  %v1113 = vrot.slane %v1111, 5
  %v1114 = vor.u32 %v1110, %v1113
  %v1115 = vrot.slane %v1114, 4
  %v1117 = vshll.u32 %v1004, 16
  %v1119 = vrot.slane %v1117, 5
  %v1120 = vsel %vm408, %v1115, %v1119
  %v1122 = vshrl.u32 %v1005, 16
  %v1124 = vrot.slane %v1122, 4
  %v1125 = vshll.u32 %v1005, 16
  %v1127 = vrot.slane %v1125, 5
  %v1128 = vor.u32 %v1124, %v1127
  %v1129 = vrot.slane %v1128, 4
  %v1131 = vshll.u32 %v1006, 16
  %v1133 = vrot.slane %v1131, 5
  %v1134 = vsel %vm408, %v1129, %v1133
  %v1136 = vshrl.u32 %v1007, 16
  %v1138 = vrot.slane %v1136, 4
  %v1139 = vshll.u32 %v1007, 16
  %v1141 = vrot.slane %v1139, 5
  %v1142 = vor.u32 %v1138, %v1141
  %v1143 = vrot.slane %v1142, 4
  %v1145 = vshll.u32 %v1008, 16
  %v1147 = vrot.slane %v1145, 5
  %v1148 = vsel %vm408, %v1143, %v1147
  %v1150 = vshrl.u32 %v1009, 16
  %v1152 = vrot.slane %v1150, 4
  %v1153 = vshll.u32 %v1009, 16
  %v1155 = vrot.slane %v1153, 5
  %v1156 = vor.u32 %v1152, %v1155
  %v1157 = vrot.slane %v1156, 4
  %v1159 = vshll.u32 %v1010, 16
  %v1161 = vrot.slane %v1159, 5
  %v1162 = vsel %vm408, %v1157, %v1161
  %v1164 = vshrl.u32 %v1011, 16
  %v1166 = vrot.slane %v1164, 4
  %v1167 = vshll.u32 %v1011, 16
  %v1169 = vrot.slane %v1167, 5
  %v1170 = vor.u32 %v1166, %v1169
  %v1171 = vrot.slane %v1170, 4
  %v1173 = vshll.u32 %v1012, 16
  %v1175 = vrot.slane %v1173, 5
  %v1176 = vsel %vm408, %v1171, %v1175
  %v1178 = vshrl.u32 %v1013, 16
  %v1180 = vrot.slane %v1178, 4
  %v1181 = vshll.u32 %v1013, 16
  %v1183 = vrot.slane %v1181, 5
  %v1184 = vor.u32 %v1180, %v1183
  %v1185 = vrot.slane %v1184, 4
  %v1187 = vshll.u32 %v1014, 16
  %v1189 = vrot.slane %v1187, 5
  %v1190 = vsel %vm408, %v1185, %v1189
  %v1192 = vshrl.u32 %v1015, 16
  %v1194 = vrot.slane %v1192, 4
  %v1195 = vshll.u32 %v1015, 16
  %v1197 = vrot.slane %v1195, 5
  %v1198 = vor.u32 %v1194, %v1197
  %v1199 = vrot.slane %v1198, 4
  %v1201 = vshll.u32 %v1016, 16
  %v1203 = vrot.slane %v1201, 5
  %v1204 = vsel %vm408, %v1199, %v1203
  %v1206 = vshrl.u32 %v1017, 16
  %v1208 = vrot.slane %v1206, 4
  %v1209 = vshll.u32 %v1017, 16
  %v1211 = vrot.slane %v1209, 5
  %v1212 = vor.u32 %v1208, %v1211
  %v1213 = vrot.slane %v1212, 4
  %v1215 = vshll.u32 %v1018, 16
  %v1217 = vrot.slane %v1215, 5
  %v1218 = vsel %vm408, %v1213, %v1217
  %v1220 = vshrl.u32 %v1019, 16
  %v1222 = vrot.slane %v1220, 4
  %v1223 = vshll.u32 %v1019, 16
  %v1225 = vrot.slane %v1223, 5
  %v1226 = vor.u32 %v1222, %v1225
  %v1227 = vrot.slane %v1226, 4
  %v1229 = vshll.u32 %v1020, 16
  %v1231 = vrot.slane %v1229, 5
  %v1232 = vsel %vm408, %v1227, %v1231
  %v1234 = vshrl.u32 %v1021, 16
  %v1236 = vrot.slane %v1234, 4
  %v1237 = vshll.u32 %v1021, 16
  %v1239 = vrot.slane %v1237, 5
  %v1240 = vor.u32 %v1236, %v1239
  %v1241 = vrot.slane %v1240, 4
  %v1243 = vshll.u32 %v1022, 16
  %v1245 = vrot.slane %v1243, 5
  %v1246 = vsel %vm408, %v1241, %v1245
  %1263 = vst.msk [vmem:[#allocation3 + $0x4] sm:$0xf] %vm21, %v1036
  %1264 = vst.msk [vmem:[#allocation3 + $0x10] sm:$0xf] %vm21, %v1050
  %1265 = vst.msk [vmem:[#allocation3 + $0x1c] sm:$0xf] %vm21, %v1064
  %1266 = vst.msk [vmem:[#allocation3 + $0x28] sm:$0xf] %vm21, %v1078
  %1267 = vst.msk [vmem:[#allocation3 + $0x34] sm:$0xf] %vm21, %v1092
  %1268 = vst.msk [vmem:[#allocation3 + $0x40] sm:$0xf] %vm21, %v1106
  %1269 = vst.msk [vmem:[#allocation3 + $0x4c] sm:$0xf] %vm21, %v1120
  %1270 = vst.msk [vmem:[#allocation3 + $0x58] sm:$0xf] %vm21, %v1134
  %1271 = vst.msk [vmem:[#allocation3 + $0x64] sm:$0xf] %vm21, %v1148
  %1272 = vst.msk [vmem:[#allocation3 + $0x70] sm:$0xf] %vm21, %v1162
  %1273 = vst.msk [vmem:[#allocation3 + $0x7c] sm:$0xf] %vm21, %v1176
  %1274 = vst.msk [vmem:[#allocation3 + $0x88] sm:$0xf] %vm21, %v1190
  %1275 = vst.msk [vmem:[#allocation3 + $0x94] sm:$0xf] %vm21, %v1204
  %1276 = vst.msk [vmem:[#allocation3 + $0xa0] sm:$0xf] %vm21, %v1218
  %1277 = vst.msk [vmem:[#allocation3 + $0xac] sm:$0xf] %vm21, %v1232
  %1278 = vst.msk [vmem:[#allocation3 + $0xb8] sm:$0xf] %vm21, %v1246
  %v1279 = vld [vmem:[%s239] sm:$0xe]
  %v1280 = vld [vmem:[%s239 + $0x4] sm:$0x1]
  %v1281 = vld [vmem:[%s239 + $0x8] sm:$0xe]
  %v1282 = vld [vmem:[%s239 + $0xc] sm:$0x1]
  %v1283 = vld [vmem:[%s239 + $0x10] sm:$0xe]
  %v1284 = vld [vmem:[%s239 + $0x14] sm:$0x1]
  %v1285 = vld [vmem:[%s239 + $0x18] sm:$0xe]
  %v1286 = vld [vmem:[%s239 + $0x1c] sm:$0x1]
  %v1287 = vld [vmem:[%s239 + $0x20] sm:$0xe]
  %v1288 = vld [vmem:[%s239 + $0x24] sm:$0x1]
  %v1289 = vld [vmem:[%s239 + $0x28] sm:$0xe]
  %v1290 = vld [vmem:[%s239 + $0x2c] sm:$0x1]
  %v1291 = vld [vmem:[%s239 + $0x30] sm:$0xe]
  %v1292 = vld [vmem:[%s239 + $0x34] sm:$0x1]
  %v1293 = vld [vmem:[%s239 + $0x38] sm:$0xe]
  %v1294 = vld [vmem:[%s239 + $0x3c] sm:$0x1]
  %v1295 = vld [vmem:[%s239 + $0x50] sm:$0xe]
  %v1296 = vld [vmem:[%s239 + $0x54] sm:$0x1]
  %v1297 = vld [vmem:[%s239 + $0x58] sm:$0xe]
  %v1298 = vld [vmem:[%s239 + $0x5c] sm:$0x1]
  %v1299 = vld [vmem:[%s239 + $0x60] sm:$0xe]
  %v1300 = vld [vmem:[%s239 + $0x64] sm:$0x1]
  %v1301 = vld [vmem:[%s239 + $0x68] sm:$0xe]
  %v1302 = vld [vmem:[%s239 + $0x6c] sm:$0x1]
  %v1303 = vld [vmem:[%s239 + $0x70] sm:$0xe]
  %v1304 = vld [vmem:[%s239 + $0x74] sm:$0x1]
  %v1305 = vld [vmem:[%s239 + $0x78] sm:$0xe]
  %v1306 = vld [vmem:[%s239 + $0x7c] sm:$0x1]
  %v1307 = vld [vmem:[%s239 + $0x80] sm:$0xe]
  %v1308 = vld [vmem:[%s239 + $0x84] sm:$0x1]
  %v1309 = vld [vmem:[%s239 + $0x88] sm:$0xe]
  %v1310 = vld [vmem:[%s239 + $0x8c] sm:$0x1]
  %v1343 = vrot.slane %v1279, 5
  %v1344 = vrot.slane %v1343, 4
  %v1345 = vrot.slane %v1280, 5
  %v1346 = vsel %vm764, %v1344, %v1345
  %v1347 = vrot.slane %v1281, 5
  %v1348 = vrot.slane %v1347, 4
  %v1349 = vrot.slane %v1282, 5
  %v1350 = vsel %vm764, %v1348, %v1349
  %v1351 = vrot.slane %v1283, 5
  %v1352 = vrot.slane %v1351, 4
  %v1353 = vrot.slane %v1284, 5
  %v1354 = vsel %vm764, %v1352, %v1353
  %v1355 = vrot.slane %v1285, 5
  %v1356 = vrot.slane %v1355, 4
  %v1357 = vrot.slane %v1286, 5
  %v1358 = vsel %vm764, %v1356, %v1357
  %v1359 = vrot.slane %v1287, 5
  %v1360 = vrot.slane %v1359, 4
  %v1361 = vrot.slane %v1288, 5
  %v1362 = vsel %vm764, %v1360, %v1361
  %v1363 = vrot.slane %v1289, 5
  %v1364 = vrot.slane %v1363, 4
  %v1365 = vrot.slane %v1290, 5
  %v1366 = vsel %vm764, %v1364, %v1365
  %v1367 = vrot.slane %v1291, 5
  %v1368 = vrot.slane %v1367, 4
  %v1369 = vrot.slane %v1292, 5
  %v1370 = vsel %vm764, %v1368, %v1369
  %v1371 = vrot.slane %v1293, 5
  %v1372 = vrot.slane %v1371, 4
  %v1373 = vrot.slane %v1294, 5
  %v1374 = vsel %vm764, %v1372, %v1373
  %v1375 = vrot.slane %v1295, 5
  %v1376 = vrot.slane %v1375, 4
  %v1377 = vrot.slane %v1296, 5
  %v1378 = vsel %vm764, %v1376, %v1377
  %v1379 = vrot.slane %v1297, 5
  %v1380 = vrot.slane %v1379, 4
  %v1381 = vrot.slane %v1298, 5
  %v1382 = vsel %vm764, %v1380, %v1381
  %v1383 = vrot.slane %v1299, 5
  %v1384 = vrot.slane %v1383, 4
  %v1385 = vrot.slane %v1300, 5
  %v1386 = vsel %vm764, %v1384, %v1385
  %v1387 = vrot.slane %v1301, 5
  %v1388 = vrot.slane %v1387, 4
  %v1389 = vrot.slane %v1302, 5
  %v1390 = vsel %vm764, %v1388, %v1389
  %v1391 = vrot.slane %v1303, 5
  %v1392 = vrot.slane %v1391, 4
  %v1393 = vrot.slane %v1304, 5
  %v1394 = vsel %vm764, %v1392, %v1393
  %v1395 = vrot.slane %v1305, 5
  %v1396 = vrot.slane %v1395, 4
  %v1397 = vrot.slane %v1306, 5
  %v1398 = vsel %vm764, %v1396, %v1397
  %v1399 = vrot.slane %v1307, 5
  %v1400 = vrot.slane %v1399, 4
  %v1401 = vrot.slane %v1308, 5
  %v1402 = vsel %vm764, %v1400, %v1401
  %v1403 = vrot.slane %v1309, 5
  %v1404 = vrot.slane %v1403, 4
  %v1405 = vrot.slane %v1310, 5
  %v1406 = vsel %vm764, %v1404, %v1405
  %1407 = vrot.lane.b32.xlu0 %v1346, 32
  %v1408 = vpop.permute.xlu0 %1407
  %1409 = vrot.lane.b32.xlu0 %v1350, 32
  %v1410 = vpop.permute.xlu0 %1409
  %1411 = vrot.lane.b32.xlu0 %v1354, 32
  %v1412 = vpop.permute.xlu0 %1411
  %1413 = vrot.lane.b32.xlu0 %v1358, 32
  %v1414 = vpop.permute.xlu0 %1413
  %1415 = vrot.lane.b32.xlu0 %v1362, 32
  %v1416 = vpop.permute.xlu0 %1415
  %1417 = vrot.lane.b32.xlu0 %v1366, 32
  %v1418 = vpop.permute.xlu0 %1417
  %1419 = vrot.lane.b32.xlu0 %v1370, 32
  %v1420 = vpop.permute.xlu0 %1419
  %1421 = vrot.lane.b32.xlu0 %v1374, 32
  %v1422 = vpop.permute.xlu0 %1421
  %1423 = vrot.lane.b32.xlu0 %v1378, 32
  %v1424 = vpop.permute.xlu0 %1423
  %1425 = vrot.lane.b32.xlu0 %v1382, 32
  %v1426 = vpop.permute.xlu0 %1425
  %1427 = vrot.lane.b32.xlu0 %v1386, 32
  %v1428 = vpop.permute.xlu0 %1427
  %1429 = vrot.lane.b32.xlu0 %v1390, 32
  %v1430 = vpop.permute.xlu0 %1429
  %1431 = vrot.lane.b32.xlu0 %v1394, 32
  %v1432 = vpop.permute.xlu0 %1431
  %1433 = vrot.lane.b32.xlu0 %v1398, 32
  %v1434 = vpop.permute.xlu0 %1433
  %1435 = vrot.lane.b32.xlu0 %v1402, 32
  %v1436 = vpop.permute.xlu0 %1435
  %1437 = vrot.lane.b32.xlu0 %v1406, 32
  %v1438 = vpop.permute.xlu0 %1437
  %1455 = vst.msk [vmem:[#allocation3 + $0x4] sm:$0xf] %vm681, %v1408
  %1456 = vst.msk [vmem:[#allocation3 + $0x10] sm:$0xf] %vm681, %v1410
  %1457 = vst.msk [vmem:[#allocation3 + $0x1c] sm:$0xf] %vm681, %v1412
  %1458 = vst.msk [vmem:[#allocation3 + $0x28] sm:$0xf] %vm681, %v1414
  %1459 = vst.msk [vmem:[#allocation3 + $0x34] sm:$0xf] %vm681, %v1416
  %1460 = vst.msk [vmem:[#allocation3 + $0x40] sm:$0xf] %vm681, %v1418
  %1461 = vst.msk [vmem:[#allocation3 + $0x4c] sm:$0xf] %vm681, %v1420
  %1462 = vst.msk [vmem:[#allocation3 + $0x58] sm:$0xf] %vm681, %v1422
  %1463 = vst.msk [vmem:[#allocation3 + $0x64] sm:$0xf] %vm681, %v1424
  %1464 = vst.msk [vmem:[#allocation3 + $0x70] sm:$0xf] %vm681, %v1426
  %1465 = vst.msk [vmem:[#allocation3 + $0x7c] sm:$0xf] %vm681, %v1428
  %1466 = vst.msk [vmem:[#allocation3 + $0x88] sm:$0xf] %vm681, %v1430
  %1467 = vst.msk [vmem:[#allocation3 + $0x94] sm:$0xf] %vm681, %v1432
  %1468 = vst.msk [vmem:[#allocation3 + $0xa0] sm:$0xf] %vm681, %v1434
  %1469 = vst.msk [vmem:[#allocation3 + $0xac] sm:$0xf] %vm681, %v1436
  %1470 = vst.msk [vmem:[#allocation3 + $0xb8] sm:$0xf] %vm681, %v1438
  %s1471 = scalar_lea.vmem [#allocation2], 16
  %v1472 = vld [vmem:[%s1471] sm:$0xf]
  %v1473 = vld [vmem:[%s1471 + $0x8] sm:$0xf]
  %v1474 = vld [vmem:[%s1471 + $0x10] sm:$0xf]
  %v1475 = vld [vmem:[%s1471 + $0x18] sm:$0xf]
  %v1476 = vld [vmem:[%s1471 + $0x20] sm:$0xf]
  %v1477 = vld [vmem:[%s1471 + $0x28] sm:$0xf]
  %v1478 = vld [vmem:[%s1471 + $0x30] sm:$0xf]
  %v1479 = vld [vmem:[%s1471 + $0x38] sm:$0xf]
  %v1480 = vld [vmem:[%s1471 + $0x50] sm:$0xf]
  %v1481 = vld [vmem:[%s1471 + $0x58] sm:$0xf]
  %v1482 = vld [vmem:[%s1471 + $0x60] sm:$0xf]
  %v1483 = vld [vmem:[%s1471 + $0x68] sm:$0xf]
  %v1484 = vld [vmem:[%s1471 + $0x70] sm:$0xf]
  %v1485 = vld [vmem:[%s1471 + $0x78] sm:$0xf]
  %v1486 = vld [vmem:[%s1471 + $0x80] sm:$0xf]
  %v1487 = vld [vmem:[%s1471 + $0x88] sm:$0xf]
  %1504 = vrot.lane.b32.xlu0 %v1472, 64
  %v1505 = vpop.permute.xlu0 %1504
  %1506 = vrot.lane.b32.xlu0 %v1473, 64
  %v1507 = vpop.permute.xlu0 %1506
  %1508 = vrot.lane.b32.xlu0 %v1474, 64
  %v1509 = vpop.permute.xlu0 %1508
  %1510 = vrot.lane.b32.xlu0 %v1475, 64
  %v1511 = vpop.permute.xlu0 %1510
  %1512 = vrot.lane.b32.xlu0 %v1476, 64
  %v1513 = vpop.permute.xlu0 %1512
  %1514 = vrot.lane.b32.xlu0 %v1477, 64
  %v1515 = vpop.permute.xlu0 %1514
  %1516 = vrot.lane.b32.xlu0 %v1478, 64
  %v1517 = vpop.permute.xlu0 %1516
  %1518 = vrot.lane.b32.xlu0 %v1479, 64
  %v1519 = vpop.permute.xlu0 %1518
  %1520 = vrot.lane.b32.xlu0 %v1480, 64
  %v1521 = vpop.permute.xlu0 %1520
  %1522 = vrot.lane.b32.xlu0 %v1481, 64
  %v1523 = vpop.permute.xlu0 %1522
  %1524 = vrot.lane.b32.xlu0 %v1482, 64
  %v1525 = vpop.permute.xlu0 %1524
  %1526 = vrot.lane.b32.xlu0 %v1483, 64
  %v1527 = vpop.permute.xlu0 %1526
  %1528 = vrot.lane.b32.xlu0 %v1484, 64
  %v1529 = vpop.permute.xlu0 %1528
  %1530 = vrot.lane.b32.xlu0 %v1485, 64
  %v1531 = vpop.permute.xlu0 %1530
  %1532 = vrot.lane.b32.xlu0 %v1486, 64
  %v1533 = vpop.permute.xlu0 %1532
  %1534 = vrot.lane.b32.xlu0 %v1487, 64
  %v1535 = vpop.permute.xlu0 %1534
  %1552 = vst.msk [vmem:[#allocation3 + $0x4] sm:$0xf] %vm877, %v1505
  %1553 = vst.msk [vmem:[#allocation3 + $0x10] sm:$0xf] %vm877, %v1507
  %1554 = vst.msk [vmem:[#allocation3 + $0x1c] sm:$0xf] %vm877, %v1509
  %1555 = vst.msk [vmem:[#allocation3 + $0x28] sm:$0xf] %vm877, %v1511
  %1556 = vst.msk [vmem:[#allocation3 + $0x34] sm:$0xf] %vm877, %v1513
  %1557 = vst.msk [vmem:[#allocation3 + $0x40] sm:$0xf] %vm877, %v1515
  %1558 = vst.msk [vmem:[#allocation3 + $0x4c] sm:$0xf] %vm877, %v1517
  %1559 = vst.msk [vmem:[#allocation3 + $0x58] sm:$0xf] %vm877, %v1519
  %1560 = vst.msk [vmem:[#allocation3 + $0x64] sm:$0xf] %vm877, %v1521
  %1561 = vst.msk [vmem:[#allocation3 + $0x70] sm:$0xf] %vm877, %v1523
  %1562 = vst.msk [vmem:[#allocation3 + $0x7c] sm:$0xf] %vm877, %v1525
  %1563 = vst.msk [vmem:[#allocation3 + $0x88] sm:$0xf] %vm877, %v1527
  %1564 = vst.msk [vmem:[#allocation3 + $0x94] sm:$0xf] %vm877, %v1529
  %1565 = vst.msk [vmem:[#allocation3 + $0xa0] sm:$0xf] %vm877, %v1531
  %1566 = vst.msk [vmem:[#allocation3 + $0xac] sm:$0xf] %vm877, %v1533
  %1567 = vst.msk [vmem:[#allocation3 + $0xb8] sm:$0xf] %vm877, %v1535
  %v1568 = vld [vmem:[%s1471] sm:$0xf]
  %v1569 = vld [vmem:[%s1471 + $0x4] sm:$0x1]
  %v1570 = vld [vmem:[%s1471 + $0x8] sm:$0xf]
  %v1571 = vld [vmem:[%s1471 + $0xc] sm:$0x1]
  %v1572 = vld [vmem:[%s1471 + $0x10] sm:$0xf]
  %v1573 = vld [vmem:[%s1471 + $0x14] sm:$0x1]
  %v1574 = vld [vmem:[%s1471 + $0x18] sm:$0xf]
  %v1575 = vld [vmem:[%s1471 + $0x1c] sm:$0x1]
  %v1576 = vld [vmem:[%s1471 + $0x20] sm:$0xf]
  %v1577 = vld [vmem:[%s1471 + $0x24] sm:$0x1]
  %v1578 = vld [vmem:[%s1471 + $0x28] sm:$0xf]
  %v1579 = vld [vmem:[%s1471 + $0x2c] sm:$0x1]
  %v1580 = vld [vmem:[%s1471 + $0x30] sm:$0xf]
  %v1581 = vld [vmem:[%s1471 + $0x34] sm:$0x1]
  %v1582 = vld [vmem:[%s1471 + $0x38] sm:$0xf]
  %v1583 = vld [vmem:[%s1471 + $0x3c] sm:$0x1]
  %v1584 = vld [vmem:[%s1471 + $0x50] sm:$0xf]
  %v1585 = vld [vmem:[%s1471 + $0x54] sm:$0x1]
  %v1586 = vld [vmem:[%s1471 + $0x58] sm:$0xf]
  %v1587 = vld [vmem:[%s1471 + $0x5c] sm:$0x1]
  %v1588 = vld [vmem:[%s1471 + $0x60] sm:$0xf]
  %v1589 = vld [vmem:[%s1471 + $0x64] sm:$0x1]
  %v1590 = vld [vmem:[%s1471 + $0x68] sm:$0xf]
  %v1591 = vld [vmem:[%s1471 + $0x6c] sm:$0x1]
  %v1592 = vld [vmem:[%s1471 + $0x70] sm:$0xf]
  %v1593 = vld [vmem:[%s1471 + $0x74] sm:$0x1]
  %v1594 = vld [vmem:[%s1471 + $0x78] sm:$0xf]
  %v1595 = vld [vmem:[%s1471 + $0x7c] sm:$0x1]
  %v1596 = vld [vmem:[%s1471 + $0x80] sm:$0xf]
  %v1597 = vld [vmem:[%s1471 + $0x84] sm:$0x1]
  %v1598 = vld [vmem:[%s1471 + $0x88] sm:$0xf]
  %v1599 = vld [vmem:[%s1471 + $0x8c] sm:$0x1]
  %v1601 = vshrl.u32 %v1568, 16
  %v1603 = vrot.slane %v1601, 4
  %v1604 = vshll.u32 %v1568, 16
  %v1606 = vrot.slane %v1604, 5
  %v1607 = vor.u32 %v1603, %v1606
  %v1608 = vrot.slane %v1607, 4
  %v1610 = vshll.u32 %v1569, 16
  %v1612 = vrot.slane %v1610, 5
  %v1613 = vsel %vm408, %v1608, %v1612
  %v1615 = vshrl.u32 %v1570, 16
  %v1617 = vrot.slane %v1615, 4
  %v1618 = vshll.u32 %v1570, 16
  %v1620 = vrot.slane %v1618, 5
  %v1621 = vor.u32 %v1617, %v1620
  %v1622 = vrot.slane %v1621, 4
  %v1624 = vshll.u32 %v1571, 16
  %v1626 = vrot.slane %v1624, 5
  %v1627 = vsel %vm408, %v1622, %v1626
  %v1629 = vshrl.u32 %v1572, 16
  %v1631 = vrot.slane %v1629, 4
  %v1632 = vshll.u32 %v1572, 16
  %v1634 = vrot.slane %v1632, 5
  %v1635 = vor.u32 %v1631, %v1634
  %v1636 = vrot.slane %v1635, 4
  %v1638 = vshll.u32 %v1573, 16
  %v1640 = vrot.slane %v1638, 5
  %v1641 = vsel %vm408, %v1636, %v1640
  %v1643 = vshrl.u32 %v1574, 16
  %v1645 = vrot.slane %v1643, 4
  %v1646 = vshll.u32 %v1574, 16
  %v1648 = vrot.slane %v1646, 5
  %v1649 = vor.u32 %v1645, %v1648
  %v1650 = vrot.slane %v1649, 4
  %v1652 = vshll.u32 %v1575, 16
  %v1654 = vrot.slane %v1652, 5
  %v1655 = vsel %vm408, %v1650, %v1654
  %v1657 = vshrl.u32 %v1576, 16
  %v1659 = vrot.slane %v1657, 4
  %v1660 = vshll.u32 %v1576, 16
  %v1662 = vrot.slane %v1660, 5
  %v1663 = vor.u32 %v1659, %v1662
  %v1664 = vrot.slane %v1663, 4
  %v1666 = vshll.u32 %v1577, 16
  %v1668 = vrot.slane %v1666, 5
  %v1669 = vsel %vm408, %v1664, %v1668
  %v1671 = vshrl.u32 %v1578, 16
  %v1673 = vrot.slane %v1671, 4
  %v1674 = vshll.u32 %v1578, 16
  %v1676 = vrot.slane %v1674, 5
  %v1677 = vor.u32 %v1673, %v1676
  %v1678 = vrot.slane %v1677, 4
  %v1680 = vshll.u32 %v1579, 16
  %v1682 = vrot.slane %v1680, 5
  %v1683 = vsel %vm408, %v1678, %v1682
  %v1685 = vshrl.u32 %v1580, 16
  %v1687 = vrot.slane %v1685, 4
  %v1688 = vshll.u32 %v1580, 16
  %v1690 = vrot.slane %v1688, 5
  %v1691 = vor.u32 %v1687, %v1690
  %v1692 = vrot.slane %v1691, 4
  %v1694 = vshll.u32 %v1581, 16
  %v1696 = vrot.slane %v1694, 5
  %v1697 = vsel %vm408, %v1692, %v1696
  %v1699 = vshrl.u32 %v1582, 16
  %v1701 = vrot.slane %v1699, 4
  %v1702 = vshll.u32 %v1582, 16
  %v1704 = vrot.slane %v1702, 5
  %v1705 = vor.u32 %v1701, %v1704
  %v1706 = vrot.slane %v1705, 4
  %v1708 = vshll.u32 %v1583, 16
  %v1710 = vrot.slane %v1708, 5
  %v1711 = vsel %vm408, %v1706, %v1710
  %v1713 = vshrl.u32 %v1584, 16
  %v1715 = vrot.slane %v1713, 4
  %v1716 = vshll.u32 %v1584, 16
  %v1718 = vrot.slane %v1716, 5
  %v1719 = vor.u32 %v1715, %v1718
  %v1720 = vrot.slane %v1719, 4
  %v1722 = vshll.u32 %v1585, 16
  %v1724 = vrot.slane %v1722, 5
  %v1725 = vsel %vm408, %v1720, %v1724
  %v1727 = vshrl.u32 %v1586, 16
  %v1729 = vrot.slane %v1727, 4
  %v1730 = vshll.u32 %v1586, 16
  %v1732 = vrot.slane %v1730, 5
  %v1733 = vor.u32 %v1729, %v1732
  %v1734 = vrot.slane %v1733, 4
  %v1736 = vshll.u32 %v1587, 16
  %v1738 = vrot.slane %v1736, 5
  %v1739 = vsel %vm408, %v1734, %v1738
  %v1741 = vshrl.u32 %v1588, 16
  %v1743 = vrot.slane %v1741, 4
  %v1744 = vshll.u32 %v1588, 16
  %v1746 = vrot.slane %v1744, 5
  %v1747 = vor.u32 %v1743, %v1746
  %v1748 = vrot.slane %v1747, 4
  %v1750 = vshll.u32 %v1589, 16
  %v1752 = vrot.slane %v1750, 5
  %v1753 = vsel %vm408, %v1748, %v1752
  %v1755 = vshrl.u32 %v1590, 16
  %v1757 = vrot.slane %v1755, 4
  %v1758 = vshll.u32 %v1590, 16
  %v1760 = vrot.slane %v1758, 5
  %v1761 = vor.u32 %v1757, %v1760
  %v1762 = vrot.slane %v1761, 4
  %v1764 = vshll.u32 %v1591, 16
  %v1766 = vrot.slane %v1764, 5
  %v1767 = vsel %vm408, %v1762, %v1766
  %v1769 = vshrl.u32 %v1592, 16
  %v1771 = vrot.slane %v1769, 4
  %v1772 = vshll.u32 %v1592, 16
  %v1774 = vrot.slane %v1772, 5
  %v1775 = vor.u32 %v1771, %v1774
  %v1776 = vrot.slane %v1775, 4
  %v1778 = vshll.u32 %v1593, 16
  %v1780 = vrot.slane %v1778, 5
  %v1781 = vsel %vm408, %v1776, %v1780
  %v1783 = vshrl.u32 %v1594, 16
  %v1785 = vrot.slane %v1783, 4
  %v1786 = vshll.u32 %v1594, 16
  %v1788 = vrot.slane %v1786, 5
  %v1789 = vor.u32 %v1785, %v1788
  %v1790 = vrot.slane %v1789, 4
  %v1792 = vshll.u32 %v1595, 16
  %v1794 = vrot.slane %v1792, 5
  %v1795 = vsel %vm408, %v1790, %v1794
  %v1797 = vshrl.u32 %v1596, 16
  %v1799 = vrot.slane %v1797, 4
  %v1800 = vshll.u32 %v1596, 16
  %v1802 = vrot.slane %v1800, 5
  %v1803 = vor.u32 %v1799, %v1802
  %v1804 = vrot.slane %v1803, 4
  %v1806 = vshll.u32 %v1597, 16
  %v1808 = vrot.slane %v1806, 5
  %v1809 = vsel %vm408, %v1804, %v1808
  %v1811 = vshrl.u32 %v1598, 16
  %v1813 = vrot.slane %v1811, 4
  %v1814 = vshll.u32 %v1598, 16
  %v1816 = vrot.slane %v1814, 5
  %v1817 = vor.u32 %v1813, %v1816
  %v1818 = vrot.slane %v1817, 4
  %v1820 = vshll.u32 %v1599, 16
  %v1822 = vrot.slane %v1820, 5
  %v1823 = vsel %vm408, %v1818, %v1822
  %1824 = vrot.lane.b32.xlu0 %v1613, 96
  %v1825 = vpop.permute.xlu0 %1824
  %1826 = vrot.lane.b32.xlu0 %v1627, 96
  %v1827 = vpop.permute.xlu0 %1826
  %1828 = vrot.lane.b32.xlu0 %v1641, 96
  %v1829 = vpop.permute.xlu0 %1828
  %1830 = vrot.lane.b32.xlu0 %v1655, 96
  %v1831 = vpop.permute.xlu0 %1830
  %1832 = vrot.lane.b32.xlu0 %v1669, 96
  %v1833 = vpop.permute.xlu0 %1832
  %1834 = vrot.lane.b32.xlu0 %v1683, 96
  %v1835 = vpop.permute.xlu0 %1834
  %1836 = vrot.lane.b32.xlu0 %v1697, 96
  %v1837 = vpop.permute.xlu0 %1836
  %1838 = vrot.lane.b32.xlu0 %v1711, 96
  %v1839 = vpop.permute.xlu0 %1838
  %1840 = vrot.lane.b32.xlu0 %v1725, 96
  %v1841 = vpop.permute.xlu0 %1840
  %1842 = vrot.lane.b32.xlu0 %v1739, 96
  %v1843 = vpop.permute.xlu0 %1842
  %1844 = vrot.lane.b32.xlu0 %v1753, 96
  %v1845 = vpop.permute.xlu0 %1844
  %1846 = vrot.lane.b32.xlu0 %v1767, 96
  %v1847 = vpop.permute.xlu0 %1846
  %1848 = vrot.lane.b32.xlu0 %v1781, 96
  %v1849 = vpop.permute.xlu0 %1848
  %1850 = vrot.lane.b32.xlu0 %v1795, 96
  %v1851 = vpop.permute.xlu0 %1850
  %1852 = vrot.lane.b32.xlu0 %v1809, 96
  %v1853 = vpop.permute.xlu0 %1852
  %1854 = vrot.lane.b32.xlu0 %v1823, 96
  %v1855 = vpop.permute.xlu0 %1854
  %1872 = vst.msk [vmem:[#allocation3 + $0x4] sm:$0xf] %vm974, %v1825
  %1873 = vst.msk [vmem:[#allocation3 + $0x10] sm:$0xf] %vm974, %v1827
  %1874 = vst.msk [vmem:[#allocation3 + $0x1c] sm:$0xf] %vm974, %v1829
  %1875 = vst.msk [vmem:[#allocation3 + $0x28] sm:$0xf] %vm974, %v1831
  %1876 = vst.msk [vmem:[#allocation3 + $0x34] sm:$0xf] %vm974, %v1833
  %1877 = vst.msk [vmem:[#allocation3 + $0x40] sm:$0xf] %vm974, %v1835
  %1878 = vst.msk [vmem:[#allocation3 + $0x4c] sm:$0xf] %vm974, %v1837
  %1879 = vst.msk [vmem:[#allocation3 + $0x58] sm:$0xf] %vm974, %v1839
  %1880 = vst.msk [vmem:[#allocation3 + $0x64] sm:$0xf] %vm974, %v1841
  %1881 = vst.msk [vmem:[#allocation3 + $0x70] sm:$0xf] %vm974, %v1843
  %1882 = vst.msk [vmem:[#allocation3 + $0x7c] sm:$0xf] %vm974, %v1845
  %1883 = vst.msk [vmem:[#allocation3 + $0x88] sm:$0xf] %vm974, %v1847
  %1884 = vst.msk [vmem:[#allocation3 + $0x94] sm:$0xf] %vm974, %v1849
  %1885 = vst.msk [vmem:[#allocation3 + $0xa0] sm:$0xf] %vm974, %v1851
  %1886 = vst.msk [vmem:[#allocation3 + $0xac] sm:$0xf] %vm974, %v1853
  %1887 = vst.msk [vmem:[#allocation3 + $0xb8] sm:$0xf] %vm974, %v1855
  %v1888 = vld [vmem:[%s1471] sm:$0xe]
  %v1889 = vld [vmem:[%s1471 + $0x4] sm:$0x1]
  %v1890 = vld [vmem:[%s1471 + $0x8] sm:$0xe]
  %v1891 = vld [vmem:[%s1471 + $0xc] sm:$0x1]
  %v1892 = vld [vmem:[%s1471 + $0x10] sm:$0xe]
  %v1893 = vld [vmem:[%s1471 + $0x14] sm:$0x1]
  %v1894 = vld [vmem:[%s1471 + $0x18] sm:$0xe]
  %v1895 = vld [vmem:[%s1471 + $0x1c] sm:$0x1]
  %v1896 = vld [vmem:[%s1471 + $0x20] sm:$0xe]
  %v1897 = vld [vmem:[%s1471 + $0x24] sm:$0x1]
  %v1898 = vld [vmem:[%s1471 + $0x28] sm:$0xe]
  %v1899 = vld [vmem:[%s1471 + $0x2c] sm:$0x1]
  %v1900 = vld [vmem:[%s1471 + $0x30] sm:$0xe]
  %v1901 = vld [vmem:[%s1471 + $0x34] sm:$0x1]
  %v1902 = vld [vmem:[%s1471 + $0x38] sm:$0xe]
  %v1903 = vld [vmem:[%s1471 + $0x3c] sm:$0x1]
  %v1904 = vld [vmem:[%s1471 + $0x50] sm:$0xe]
  %v1905 = vld [vmem:[%s1471 + $0x54] sm:$0x1]
  %v1906 = vld [vmem:[%s1471 + $0x58] sm:$0xe]
  %v1907 = vld [vmem:[%s1471 + $0x5c] sm:$0x1]
  %v1908 = vld [vmem:[%s1471 + $0x60] sm:$0xe]
  %v1909 = vld [vmem:[%s1471 + $0x64] sm:$0x1]
  %v1910 = vld [vmem:[%s1471 + $0x68] sm:$0xe]
  %v1911 = vld [vmem:[%s1471 + $0x6c] sm:$0x1]
  %v1912 = vld [vmem:[%s1471 + $0x70] sm:$0xe]
  %v1913 = vld [vmem:[%s1471 + $0x74] sm:$0x1]
  %v1914 = vld [vmem:[%s1471 + $0x78] sm:$0xe]
  %v1915 = vld [vmem:[%s1471 + $0x7c] sm:$0x1]
  %v1916 = vld [vmem:[%s1471 + $0x80] sm:$0xe]
  %v1917 = vld [vmem:[%s1471 + $0x84] sm:$0x1]
  %v1918 = vld [vmem:[%s1471 + $0x88] sm:$0xe]
  %v1919 = vld [vmem:[%s1471 + $0x8c] sm:$0x1]
  %v1952 = vrot.slane %v1888, 5
  %v1953 = vrot.slane %v1952, 4
  %v1954 = vrot.slane %v1889, 5
  %v1955 = vsel %vm764, %v1953, %v1954
  %v1956 = vrot.slane %v1890, 5
  %v1957 = vrot.slane %v1956, 4
  %v1958 = vrot.slane %v1891, 5
  %v1959 = vsel %vm764, %v1957, %v1958
  %v1960 = vrot.slane %v1892, 5
  %v1961 = vrot.slane %v1960, 4
  %v1962 = vrot.slane %v1893, 5
  %v1963 = vsel %vm764, %v1961, %v1962
  %v1964 = vrot.slane %v1894, 5
  %v1965 = vrot.slane %v1964, 4
  %v1966 = vrot.slane %v1895, 5
  %v1967 = vsel %vm764, %v1965, %v1966
  %v1968 = vrot.slane %v1896, 5
  %v1969 = vrot.slane %v1968, 4
  %v1970 = vrot.slane %v1897, 5
  %v1971 = vsel %vm764, %v1969, %v1970
  %v1972 = vrot.slane %v1898, 5
  %v1973 = vrot.slane %v1972, 4
  %v1974 = vrot.slane %v1899, 5
  %v1975 = vsel %vm764, %v1973, %v1974
  %v1976 = vrot.slane %v1900, 5
  %v1977 = vrot.slane %v1976, 4
  %v1978 = vrot.slane %v1901, 5
  %v1979 = vsel %vm764, %v1977, %v1978
  %v1980 = vrot.slane %v1902, 5
  %v1981 = vrot.slane %v1980, 4
  %v1982 = vrot.slane %v1903, 5
  %v1983 = vsel %vm764, %v1981, %v1982
  %v1984 = vrot.slane %v1904, 5
  %v1985 = vrot.slane %v1984, 4
  %v1986 = vrot.slane %v1905, 5
  %v1987 = vsel %vm764, %v1985, %v1986
  %v1988 = vrot.slane %v1906, 5
  %v1989 = vrot.slane %v1988, 4
  %v1990 = vrot.slane %v1907, 5
  %v1991 = vsel %vm764, %v1989, %v1990
  %v1992 = vrot.slane %v1908, 5
  %v1993 = vrot.slane %v1992, 4
  %v1994 = vrot.slane %v1909, 5
  %v1995 = vsel %vm764, %v1993, %v1994
  %v1996 = vrot.slane %v1910, 5
  %v1997 = vrot.slane %v1996, 4
  %v1998 = vrot.slane %v1911, 5
  %v1999 = vsel %vm764, %v1997, %v1998
  %v2000 = vrot.slane %v1912, 5
  %v2001 = vrot.slane %v2000, 4
  %v2002 = vrot.slane %v1913, 5
  %v2003 = vsel %vm764, %v2001, %v2002
  %v2004 = vrot.slane %v1914, 5
  %v2005 = vrot.slane %v2004, 4
  %v2006 = vrot.slane %v1915, 5
  %v2007 = vsel %vm764, %v2005, %v2006
  %v2008 = vrot.slane %v1916, 5
  %v2009 = vrot.slane %v2008, 4
  %v2010 = vrot.slane %v1917, 5
  %v2011 = vsel %vm764, %v2009, %v2010
  %v2012 = vrot.slane %v1918, 5
  %v2013 = vrot.slane %v2012, 4
  %v2014 = vrot.slane %v1919, 5
  %v2015 = vsel %vm764, %v2013, %v2014
  %2032 = vst.msk [vmem:[#allocation3 + $0x8] sm:$0xf] %vm21, %v1955
  %2033 = vst.msk [vmem:[#allocation3 + $0x14] sm:$0xf] %vm21, %v1959
  %2034 = vst.msk [vmem:[#allocation3 + $0x20] sm:$0xf] %vm21, %v1963
  %2035 = vst.msk [vmem:[#allocation3 + $0x2c] sm:$0xf] %vm21, %v1967
  %2036 = vst.msk [vmem:[#allocation3 + $0x38] sm:$0xf] %vm21, %v1971
  %2037 = vst.msk [vmem:[#allocation3 + $0x44] sm:$0xf] %vm21, %v1975
  %2038 = vst.msk [vmem:[#allocation3 + $0x50] sm:$0xf] %vm21, %v1979
  %2039 = vst.msk [vmem:[#allocation3 + $0x5c] sm:$0xf] %vm21, %v1983
  %2040 = vst.msk [vmem:[#allocation3 + $0x68] sm:$0xf] %vm21, %v1987
  %2041 = vst.msk [vmem:[#allocation3 + $0x74] sm:$0xf] %vm21, %v1991
  %2042 = vst.msk [vmem:[#allocation3 + $0x80] sm:$0xf] %vm21, %v1995
  %2043 = vst.msk [vmem:[#allocation3 + $0x8c] sm:$0xf] %vm21, %v1999
  %2044 = vst.msk [vmem:[#allocation3 + $0x98] sm:$0xf] %vm21, %v2003
  %2045 = vst.msk [vmem:[#allocation3 + $0xa4] sm:$0xf] %vm21, %v2007
  %2046 = vst.msk [vmem:[#allocation3 + $0xb0] sm:$0xf] %vm21, %v2011
  %2047 = vst.msk [vmem:[#allocation3 + $0xbc] sm:$0xf] %vm21, %v2015
  %v2048 = vld [vmem:[#allocation3] sm:$0xff]
  %v2049 = vld [vmem:[#allocation3 + $0x8] sm:$0xf]
  %v2050 = vld [vmem:[#allocation3 + $0xc] sm:$0xff]
  %v2051 = vld [vmem:[#allocation3 + $0x14] sm:$0xf]
  %v2052 = vld [vmem:[#allocation3 + $0x18] sm:$0xff]
  %v2053 = vld [vmem:[#allocation3 + $0x20] sm:$0xf]
  %v2054 = vld [vmem:[#allocation3 + $0x24] sm:$0xff]
  %v2055 = vld [vmem:[#allocation3 + $0x2c] sm:$0xf]
  %v2056 = vld [vmem:[#allocation3 + $0x30] sm:$0xff]
  %v2057 = vld [vmem:[#allocation3 + $0x38] sm:$0xf]
  %v2058 = vld [vmem:[#allocation3 + $0x3c] sm:$0xff]
  %v2059 = vld [vmem:[#allocation3 + $0x44] sm:$0xf]
  %v2060 = vld [vmem:[#allocation3 + $0x48] sm:$0xff]
  %v2061 = vld [vmem:[#allocation3 + $0x50] sm:$0xf]
  %v2062 = vld [vmem:[#allocation3 + $0x54] sm:$0xff]
  %v2063 = vld [vmem:[#allocation3 + $0x5c] sm:$0xf]
  %v2064 = vld [vmem:[#allocation3 + $0x60] sm:$0xff]
  %v2065 = vld [vmem:[#allocation3 + $0x68] sm:$0xf]
  %v2066 = vld [vmem:[#allocation3 + $0x6c] sm:$0xff]
  %v2067 = vld [vmem:[#allocation3 + $0x74] sm:$0xf]
  %v2068 = vld [vmem:[#allocation3 + $0x78] sm:$0xff]
  %v2069 = vld [vmem:[#allocation3 + $0x80] sm:$0xf]
  %v2070 = vld [vmem:[#allocation3 + $0x84] sm:$0xff]
  %v2071 = vld [vmem:[#allocation3 + $0x8c] sm:$0xf]
  %v2072 = vld [vmem:[#allocation3 + $0x90] sm:$0xff]
  %v2073 = vld [vmem:[#allocation3 + $0x98] sm:$0xf]
  %v2074 = vld [vmem:[#allocation3 + $0x9c] sm:$0xff]
  %v2075 = vld [vmem:[#allocation3 + $0xa4] sm:$0xf]
  %v2076 = vld [vmem:[#allocation3 + $0xa8] sm:$0xff]
  %v2077 = vld [vmem:[#allocation3 + $0xb0] sm:$0xf]
  %v2078 = vld [vmem:[#allocation3 + $0xb4] sm:$0xff]
  %v2079 = vld [vmem:[#allocation3 + $0xbc] sm:$0xf]
  %v2080 = vld [vmem:[%s1] sm:$0xf]
  %v2081 = vld [vmem:[%s1 + $0x4] sm:$0xf]
  %v2082 = vld [vmem:[%s1 + $0x8] sm:$0xf]
  %v2083 = vld [vmem:[%s1 + $0xc] sm:$0xf]
  %v2084 = vld [vmem:[%s1 + $0x10] sm:$0xf]
  %v2085 = vld [vmem:[%s1 + $0x14] sm:$0xf]
  %v2086 = vld [vmem:[%s1 + $0x18] sm:$0xf]
  %v2087 = vld [vmem:[%s1 + $0x1c] sm:$0xf]
  %v2088 = vld [vmem:[%s1 + $0x20] sm:$0xf]
  %v2089 = vld [vmem:[%s1 + $0x24] sm:$0xf]
  %v2090 = vld [vmem:[%s1 + $0x28] sm:$0xf]
  %v2091 = vld [vmem:[%s1 + $0x2c] sm:$0xf]
  %v2092 = vld [vmem:[%s1 + $0x30] sm:$0xf]
  %v2093 = vld [vmem:[%s1 + $0x34] sm:$0xf]
  %v2094 = vld [vmem:[%s1 + $0x38] sm:$0xf]
  %v2095 = vld [vmem:[%s1 + $0x3c] sm:$0xf]
  %v2096 = vld [vmem:[%s1 + $0x40] sm:$0xf]
  %v2097 = vld [vmem:[%s1 + $0x44] sm:$0xf]
  %v2098 = vld [vmem:[%s1 + $0x48] sm:$0xf]
  %v2099 = vld [vmem:[%s1 + $0x4c] sm:$0xf]
  %v2100 = vld [vmem:[%s1 + $0x50] sm:$0xf]
  %v2101 = vld [vmem:[%s1 + $0x54] sm:$0xf]
  %v2102 = vld [vmem:[%s1 + $0x58] sm:$0xf]
  %v2103 = vld [vmem:[%s1 + $0x5c] sm:$0xf]
  %v2104 = vld [vmem:[%s1 + $0x60] sm:$0xf]
  %v2105 = vld [vmem:[%s1 + $0x64] sm:$0xf]
  %v2106 = vld [vmem:[%s1 + $0x68] sm:$0xf]
  %v2107 = vld [vmem:[%s1 + $0x6c] sm:$0xf]
  %v2108 = vld [vmem:[%s1 + $0x70] sm:$0xf]
  %v2109 = vld [vmem:[%s1 + $0x74] sm:$0xf]
  %v2110 = vld [vmem:[%s1 + $0x78] sm:$0xf]
  %v2111 = vld [vmem:[%s1 + $0x7c] sm:$0xf]
  %v2112 = vld [vmem:[%s1 + $0x80] sm:$0xf]
  %v2113 = vld [vmem:[%s1 + $0x84] sm:$0xf]
  %v2114 = vld [vmem:[%s1 + $0x88] sm:$0xf]
  %v2115 = vld [vmem:[%s1 + $0x8c] sm:$0xf]
  %v2116 = vld [vmem:[%s2] sm:$0x1]
  %v2118 = vlaneseq
  %v2119 = vshrl.u32 %v2118, 7
  %v2120 = vsub.s32 0, %v2119
  %v2121 = vrot.slane %v2116, %v2120
  %v2155 = vunpack.c.l.b16 %v2048
  %v2156 = vunpack.c.h.b16 %v2048
  %v2157 = vunpack.c.l.b16 %v2049
  %v2158 = vunpack.c.l.b16 %v2050
  %v2159 = vunpack.c.h.b16 %v2050
  %v2160 = vunpack.c.l.b16 %v2051
  %v2161 = vunpack.c.l.b16 %v2052
  %v2162 = vunpack.c.h.b16 %v2052
  %v2163 = vunpack.c.l.b16 %v2053
  %v2164 = vunpack.c.l.b16 %v2054
  %v2165 = vunpack.c.h.b16 %v2054
  %v2166 = vunpack.c.l.b16 %v2055
  %v2167 = vunpack.c.l.b16 %v2056
  %v2168 = vunpack.c.h.b16 %v2056
  %v2169 = vunpack.c.l.b16 %v2057
  %v2170 = vunpack.c.l.b16 %v2058
  %v2171 = vunpack.c.h.b16 %v2058
  %v2172 = vunpack.c.l.b16 %v2059
  %v2173 = vunpack.c.l.b16 %v2060
  %v2174 = vunpack.c.h.b16 %v2060
  %v2175 = vunpack.c.l.b16 %v2061
  %v2176 = vunpack.c.l.b16 %v2062
  %v2177 = vunpack.c.h.b16 %v2062
  %v2178 = vunpack.c.l.b16 %v2063
  %v2179 = vunpack.c.l.b16 %v2064
  %v2180 = vunpack.c.h.b16 %v2064
  %v2181 = vunpack.c.l.b16 %v2065
  %v2182 = vunpack.c.l.b16 %v2066
  %v2183 = vunpack.c.h.b16 %v2066
  %v2184 = vunpack.c.l.b16 %v2067
  %v2185 = vunpack.c.l.b16 %v2068
  %v2186 = vunpack.c.h.b16 %v2068
  %v2187 = vunpack.c.l.b16 %v2069
  %v2188 = vunpack.c.l.b16 %v2070
  %v2189 = vunpack.c.h.b16 %v2070
  %v2190 = vunpack.c.l.b16 %v2071
  %v2191 = vunpack.c.l.b16 %v2072
  %v2192 = vunpack.c.h.b16 %v2072
  %v2193 = vunpack.c.l.b16 %v2073
  %v2194 = vunpack.c.l.b16 %v2074
  %v2195 = vunpack.c.h.b16 %v2074
  %v2196 = vunpack.c.l.b16 %v2075
  %v2197 = vunpack.c.l.b16 %v2076
  %v2198 = vunpack.c.h.b16 %v2076
  %v2199 = vunpack.c.l.b16 %v2077
  %v2200 = vunpack.c.l.b16 %v2078
  %v2201 = vunpack.c.h.b16 %v2078
  %v2202 = vunpack.c.l.b16 %v2079
  %v2203 = vpack.c.b16 %v2158, %v2155
  %v2204 = vpack.c.b16 %v2159, %v2156
  %v2205 = vpack.c.b16 %v2160, %v2157
  %v2206 = vpack.c.b16 %v2164, %v2161
  %v2207 = vpack.c.b16 %v2165, %v2162
  %v2208 = vpack.c.b16 %v2166, %v2163
  %v2209 = vpack.c.b16 %v2170, %v2167
  %v2210 = vpack.c.b16 %v2171, %v2168
  %v2211 = vpack.c.b16 %v2172, %v2169
  %v2212 = vpack.c.b16 %v2176, %v2173
  %v2213 = vpack.c.b16 %v2177, %v2174
  %v2214 = vpack.c.b16 %v2178, %v2175
  %v2215 = vpack.c.b16 %v2182, %v2179
  %v2216 = vpack.c.b16 %v2183, %v2180
  %v2217 = vpack.c.b16 %v2184, %v2181
  %v2218 = vpack.c.b16 %v2188, %v2185
  %v2219 = vpack.c.b16 %v2189, %v2186
  %v2220 = vpack.c.b16 %v2190, %v2187
  %v2221 = vpack.c.b16 %v2194, %v2191
  %v2222 = vpack.c.b16 %v2195, %v2192
  %v2223 = vpack.c.b16 %v2196, %v2193
  %v2224 = vpack.c.b16 %v2200, %v2197
  %v2225 = vpack.c.b16 %v2201, %v2198
  %v2226 = vpack.c.b16 %v2202, %v2199
  %v2279 = vunpack.c.l.b16 %v2080
  %v2280 = vunpack.c.l.b16 %v2081
  %v2281 = vunpack.c.l.b16 %v2082
  %v2282 = vunpack.c.l.b16 %v2083
  %v2283 = vunpack.c.l.b16 %v2084
  %v2284 = vunpack.c.l.b16 %v2085
  %v2285 = vunpack.c.l.b16 %v2086
  %v2286 = vunpack.c.l.b16 %v2087
  %v2287 = vunpack.c.l.b16 %v2088
  %v2288 = vunpack.c.l.b16 %v2089
  %v2289 = vunpack.c.l.b16 %v2090
  %v2290 = vunpack.c.l.b16 %v2091
  %v2291 = vunpack.c.l.b16 %v2092
  %v2292 = vunpack.c.l.b16 %v2093
  %v2293 = vunpack.c.l.b16 %v2094
  %v2294 = vunpack.c.l.b16 %v2095
  %v2295 = vunpack.c.l.b16 %v2096
  %v2296 = vunpack.c.l.b16 %v2097
  %v2297 = vunpack.c.l.b16 %v2098
  %v2298 = vunpack.c.l.b16 %v2099
  %v2299 = vunpack.c.l.b16 %v2100
  %v2300 = vunpack.c.l.b16 %v2101
  %v2301 = vunpack.c.l.b16 %v2102
  %v2302 = vunpack.c.l.b16 %v2103
  %v2303 = vunpack.c.l.b16 %v2104
  %v2304 = vunpack.c.l.b16 %v2105
  %v2305 = vunpack.c.l.b16 %v2106
  %v2306 = vunpack.c.l.b16 %v2107
  %v2307 = vunpack.c.l.b16 %v2108
  %v2308 = vunpack.c.l.b16 %v2109
  %v2309 = vunpack.c.l.b16 %v2110
  %v2310 = vunpack.c.l.b16 %v2111
  %v2311 = vunpack.c.l.b16 %v2112
  %v2312 = vunpack.c.l.b16 %v2113
  %v2313 = vunpack.c.l.b16 %v2114
  %v2314 = vunpack.c.l.b16 %v2115
  %v2315 = vpack.c.b16 %v2280, %v2279
  %v2316 = vpack.c.b16 %v2282, %v2281
  %v2317 = vpack.c.b16 %v2284, %v2283
  %v2318 = vpack.c.b16 %v2286, %v2285
  %v2319 = vpack.c.b16 %v2288, %v2287
  %v2320 = vpack.c.b16 %v2290, %v2289
  %v2321 = vpack.c.b16 %v2292, %v2291
  %v2322 = vpack.c.b16 %v2294, %v2293
  %v2323 = vpack.c.b16 %v2296, %v2295
  %v2324 = vpack.c.b16 %v2298, %v2297
  %v2325 = vpack.c.b16 %v2300, %v2299
  %v2326 = vpack.c.b16 %v2302, %v2301
  %v2327 = vpack.c.b16 %v2304, %v2303
  %v2328 = vpack.c.b16 %v2306, %v2305
  %v2329 = vpack.c.b16 %v2308, %v2307
  %v2330 = vpack.c.b16 %v2310, %v2309
  %v2331 = vpack.c.b16 %v2312, %v2311
  %v2332 = vpack.c.b16 %v2314, %v2313
  %vm2351 = vcmask 261120
  %v2353 = vsel %vm2351, %v2205, 0
  %v2356 = vsel %vm2351, %v2208, 0
  %v2359 = vsel %vm2351, %v2211, 0
  %v2362 = vsel %vm2351, %v2214, 0
  %v2365 = vsel %vm2351, %v2217, 0
  %v2368 = vsel %vm2351, %v2220, 0
  %v2371 = vsel %vm2351, %v2223, 0
  %v2374 = vsel %vm2351, %v2226, 0
  %2376 = vmatprep.subr.bf16.mxu0 0
  %2377 = vmatpush1.bf16.msra.mxu0 %v2322
  %2378 = vmatprep.subr.bf16.mxu0 0
  %2379 = vmatpush1.bf16.msra.mxu0 %v2321
  %2380 = vmatprep.subr.bf16.mxu0 0
  %2381 = vmatpush1.bf16.msra.mxu0 %v2320
  %2382 = vmatprep.subr.bf16.mxu0 0
  %2383 = vmatpush1.bf16.msra.mxu0 %v2319
  %2384 = vmatprep.subr.bf16.mxu0 0
  %2385 = vmatpush1.bf16.msra.mxu0 %v2318
  %2386 = vmatprep.subr.bf16.mxu0 0
  %2387 = vmatpush1.bf16.msra.mxu0 %v2317
  %2388 = vmatprep.subr.bf16.mxu0 0
  %2389 = vmatpush1.bf16.msra.mxu0 %v2316
  %2390 = vmatprep.subr.bf16.mxu0 0
  %2391 = vmatpush1.bf16.msra.mxu0 %v2315
  %2392 = vmatprep.subr.bf16.mxu0 0
  %2393 = vmatpush2.bf16.msra.mxu0 %v2330
  %2394 = vmatprep.subr.bf16.mxu0 0
  %2395 = vmatpush2.bf16.msra.mxu0 %v2329
  %2396 = vmatprep.subr.bf16.mxu0 0
  %2397 = vmatpush2.bf16.msra.mxu0 %v2328
  %2398 = vmatprep.subr.bf16.mxu0 0
  %2399 = vmatpush2.bf16.msra.mxu0 %v2327
  %2400 = vmatprep.subr.bf16.mxu0 0
  %2401 = vmatpush2.bf16.msra.mxu0 %v2326
  %2402 = vmatprep.subr.bf16.mxu0 0
  %2403 = vmatpush2.bf16.msra.mxu0 %v2325
  %2404 = vmatprep.subr.bf16.mxu0 0
  %2405 = vmatpush2.bf16.msra.mxu0 %v2324
  %2406 = vmatprep.subr.bf16.mxu0 0
  %2407 = vmatpush2.bf16.msra.mxu0 %v2323
  %2408 = vmatprep.mubr.bf16.mxu0 %v2204
  %2409 = vmatmul.mubr.bf16.gmra.mxu0 %v2203
  %v2410 = vpop.f32.mrf.mxu0
  %v2411 = vadd.f32 %v2121, %v2410
  %v2412 = vpop.f32.mrf.mxu0
  %v2413 = vpop.f32.mrf.mxu0
  %v2414 = vadd.f32 %v2121, %v2413
  %v2415 = vpop.f32.mrf.mxu0
  %2416 = vmatprep.mubr.bf16.mxu0 %v2207
  %2417 = vmatmul.mubr.bf16.gmra.mxu0 %v2206
  %v2418 = vpop.f32.mrf.mxu0
  %v2419 = vadd.f32 %v2121, %v2418
  %v2420 = vpop.f32.mrf.mxu0
  %v2421 = vpop.f32.mrf.mxu0
  %v2422 = vadd.f32 %v2121, %v2421
  %v2423 = vpop.f32.mrf.mxu0
  %2424 = vmatprep.mubr.bf16.mxu0 %v2210
  %2425 = vmatmul.mubr.bf16.gmra.mxu0 %v2209
  %v2426 = vpop.f32.mrf.mxu0
  %v2427 = vadd.f32 %v2121, %v2426
  %v2428 = vpop.f32.mrf.mxu0
  %v2429 = vpop.f32.mrf.mxu0
  %v2430 = vadd.f32 %v2121, %v2429
  %v2431 = vpop.f32.mrf.mxu0
  %2432 = vmatprep.mubr.bf16.mxu0 %v2213
  %2433 = vmatmul.mubr.bf16.gmra.mxu0 %v2212
  %v2434 = vpop.f32.mrf.mxu0
  %v2435 = vadd.f32 %v2121, %v2434
  %v2436 = vpop.f32.mrf.mxu0
  %v2437 = vpop.f32.mrf.mxu0
  %v2438 = vadd.f32 %v2121, %v2437
  %v2439 = vpop.f32.mrf.mxu0
  %2440 = vmatprep.mubr.bf16.mxu0 %v2216
  %2441 = vmatmul.mubr.bf16.gmra.mxu0 %v2215
  %v2442 = vpop.f32.mrf.mxu0
  %v2443 = vadd.f32 %v2121, %v2442
  %v2444 = vpop.f32.mrf.mxu0
  %v2445 = vpop.f32.mrf.mxu0
  %v2446 = vadd.f32 %v2121, %v2445
  %v2447 = vpop.f32.mrf.mxu0
  %2448 = vmatprep.mubr.bf16.mxu0 %v2219
  %2449 = vmatmul.mubr.bf16.gmra.mxu0 %v2218
  %v2450 = vpop.f32.mrf.mxu0
  %v2451 = vadd.f32 %v2121, %v2450
  %v2452 = vpop.f32.mrf.mxu0
  %v2453 = vpop.f32.mrf.mxu0
  %v2454 = vadd.f32 %v2121, %v2453
  %v2455 = vpop.f32.mrf.mxu0
  %2456 = vmatprep.mubr.bf16.mxu0 %v2222
  %2457 = vmatmul.mubr.bf16.gmra.mxu0 %v2221
  %v2458 = vpop.f32.mrf.mxu0
  %v2459 = vadd.f32 %v2121, %v2458
  %v2460 = vpop.f32.mrf.mxu0
  %v2461 = vpop.f32.mrf.mxu0
  %v2462 = vadd.f32 %v2121, %v2461
  %v2463 = vpop.f32.mrf.mxu0
  %2464 = vmatprep.mubr.bf16.mxu0 %v2225
  %2465 = vmatmul.mubr.bf16.gmra.mxu0 %v2224
  %v2466 = vpop.f32.mrf.mxu0
  %v2467 = vadd.f32 %v2121, %v2466
  %v2468 = vpop.f32.mrf.mxu0
  %v2469 = vpop.f32.mrf.mxu0
  %v2470 = vadd.f32 %v2121, %v2469
  %v2471 = vpop.f32.mrf.mxu0
  %2472 = vdwg.mxu0
  %2473 = vmatprep.subr.bf16.mxu0 0
  %2474 = vmatpush1.bf16.msra.mxu0 0
  %2475 = vmatprep.subr.bf16.mxu0 0
  %2476 = vmatpush1.bf16.msra.mxu0 0
  %2477 = vmatprep.subr.bf16.mxu0 0
  %2478 = vmatpush1.bf16.msra.mxu0 0
  %2479 = vmatprep.subr.bf16.mxu0 0
  %2480 = vmatpush1.bf16.msra.mxu0 0
  %2481 = vmatprep.subr.bf16.mxu0 0
  %2482 = vmatpush1.bf16.msra.mxu0 0
  %2483 = vmatprep.subr.bf16.mxu0 0
  %2484 = vmatpush1.bf16.msra.mxu0 0
  %2485 = vmatprep.subr.bf16.mxu0 0
  %2486 = vmatpush1.bf16.msra.mxu0 %v2332
  %2487 = vmatprep.subr.bf16.mxu0 0
  %2488 = vmatpush1.bf16.msra.mxu0 %v2331
  %2489 = vmatprep.subr.bf16.mxu0 0
  %2490 = vmatpush2.bf16.msra.mxu0 0
  %2491 = vmatprep.subr.bf16.mxu0 0
  %2492 = vmatpush2.bf16.msra.mxu0 0
  %2493 = vmatprep.subr.bf16.mxu0 0
  %2494 = vmatpush2.bf16.msra.mxu0 0
  %2495 = vmatprep.subr.bf16.mxu0 0
  %2496 = vmatpush2.bf16.msra.mxu0 0
  %2497 = vmatprep.subr.bf16.mxu0 0
  %2498 = vmatpush2.bf16.msra.mxu0 0
  %2499 = vmatprep.subr.bf16.mxu0 0
  %2500 = vmatpush2.bf16.msra.mxu0 0
  %2501 = vmatprep.subr.bf16.mxu0 0
  %2502 = vmatpush2.bf16.msra.mxu0 0
  %2503 = vmatprep.subr.bf16.mxu0 0
  %2504 = vmatpush2.bf16.msra.mxu0 0
  %2505 = vmatprep.mubr.bf16.mxu0 0
  %2506 = vmatmul.mubr.bf16.gmra.mxu0 %v2353
  %v2507 = vpop.f32.mrf.mxu0
  %v2508 = vadd.f32 %v2411, %v2507
  %v2509 = vpop.f32.mrf.mxu0
  %v2510 = vpop.f32.mrf.mxu0
  %v2511 = vadd.f32 %v2414, %v2510
  %v2512 = vpop.f32.mrf.mxu0
  %2513 = vmatprep.mubr.bf16.mxu0 0
  %2514 = vmatmul.mubr.bf16.gmra.mxu0 %v2356
  %v2515 = vpop.f32.mrf.mxu0
  %v2516 = vadd.f32 %v2419, %v2515
  %v2517 = vpop.f32.mrf.mxu0
  %v2518 = vpop.f32.mrf.mxu0
  %v2519 = vadd.f32 %v2422, %v2518
  %v2520 = vpop.f32.mrf.mxu0
  %2521 = vmatprep.mubr.bf16.mxu0 0
  %2522 = vmatmul.mubr.bf16.gmra.mxu0 %v2359
  %v2523 = vpop.f32.mrf.mxu0
  %v2524 = vadd.f32 %v2427, %v2523
  %v2525 = vpop.f32.mrf.mxu0
  %v2526 = vpop.f32.mrf.mxu0
  %v2527 = vadd.f32 %v2430, %v2526
  %v2528 = vpop.f32.mrf.mxu0
  %2529 = vmatprep.mubr.bf16.mxu0 0
  %2530 = vmatmul.mubr.bf16.gmra.mxu0 %v2362
  %v2531 = vpop.f32.mrf.mxu0
  %v2532 = vadd.f32 %v2435, %v2531
  %v2533 = vpop.f32.mrf.mxu0
  %v2534 = vpop.f32.mrf.mxu0
  %v2535 = vadd.f32 %v2438, %v2534
  %v2536 = vpop.f32.mrf.mxu0
  %2537 = vmatprep.mubr.bf16.mxu0 0
  %2538 = vmatmul.mubr.bf16.gmra.mxu0 %v2365
  %v2539 = vpop.f32.mrf.mxu0
  %v2540 = vadd.f32 %v2443, %v2539
  %v2541 = vpop.f32.mrf.mxu0
  %v2542 = vpop.f32.mrf.mxu0
  %v2543 = vadd.f32 %v2446, %v2542
  %v2544 = vpop.f32.mrf.mxu0
  %2545 = vmatprep.mubr.bf16.mxu0 0
  %2546 = vmatmul.mubr.bf16.gmra.mxu0 %v2368
  %v2547 = vpop.f32.mrf.mxu0
  %v2548 = vadd.f32 %v2451, %v2547
  %v2549 = vpop.f32.mrf.mxu0
  %v2550 = vpop.f32.mrf.mxu0
  %v2551 = vadd.f32 %v2454, %v2550
  %v2552 = vpop.f32.mrf.mxu0
  %2553 = vmatprep.mubr.bf16.mxu0 0
  %2554 = vmatmul.mubr.bf16.gmra.mxu0 %v2371
  %v2555 = vpop.f32.mrf.mxu0
  %v2556 = vadd.f32 %v2459, %v2555
  %v2557 = vpop.f32.mrf.mxu0
  %v2558 = vpop.f32.mrf.mxu0
  %v2559 = vadd.f32 %v2462, %v2558
  %v2560 = vpop.f32.mrf.mxu0
  %2561 = vmatprep.mubr.bf16.mxu0 0
  %2562 = vmatmul.mubr.bf16.gmra.mxu0 %v2374
  %v2563 = vpop.f32.mrf.mxu0
  %v2564 = vadd.f32 %v2467, %v2563
  %v2565 = vpop.f32.mrf.mxu0
  %v2566 = vpop.f32.mrf.mxu0
  %v2567 = vadd.f32 %v2470, %v2566
  %v2568 = vpop.f32.mrf.mxu0
  %2569 = vdwg.mxu0
  %v2570 = vmax.f32 %v2508, 0.0
  %v2571 = vmax.f32 %v2511, 0.0
  %v2572 = vmax.f32 %v2516, 0.0
  %v2573 = vmax.f32 %v2519, 0.0
  %v2574 = vmax.f32 %v2524, 0.0
  %v2575 = vmax.f32 %v2527, 0.0
  %v2576 = vmax.f32 %v2532, 0.0
  %v2577 = vmax.f32 %v2535, 0.0
  %v2578 = vmax.f32 %v2540, 0.0
  %v2579 = vmax.f32 %v2543, 0.0
  %v2580 = vmax.f32 %v2548, 0.0
  %v2581 = vmax.f32 %v2551, 0.0
  %v2582 = vmax.f32 %v2556, 0.0
  %v2583 = vmax.f32 %v2559, 0.0
  %v2584 = vmax.f32 %v2564, 0.0
  %v2585 = vmax.f32 %v2567, 0.0
  %v2586 = vpack.c.bf16 %v2571, %v2570
  %v2587 = vpack.c.bf16 %v2573, %v2572
  %v2588 = vpack.c.bf16 %v2575, %v2574
  %v2589 = vpack.c.bf16 %v2577, %v2576
  %v2590 = vpack.c.bf16 %v2579, %v2578
  %v2591 = vpack.c.bf16 %v2581, %v2580
  %v2592 = vpack.c.bf16 %v2583, %v2582
  %v2593 = vpack.c.bf16 %v2585, %v2584
  %v2594 = vld [vmem:[%s3] sm:$0xf]
  %v2595 = vld [vmem:[%s4] sm:$0x1]
  %v2597 = vlaneseq
  %v2598 = vshrl.u32 %v2597, 7
  %v2599 = vsub.s32 0, %v2598
  %v2600 = vrot.slane %v2595, %v2599
  %vm2602 = vcmask 64512
  %v2604 = vsel %vm2602, %v2586, 0
  %v2607 = vsel %vm2602, %v2587, 0
  %v2610 = vsel %vm2602, %v2588, 0
  %v2613 = vsel %vm2602, %v2589, 0
  %v2616 = vsel %vm2602, %v2590, 0
  %v2619 = vsel %vm2602, %v2591, 0
  %v2622 = vsel %vm2602, %v2592, 0
  %v2625 = vsel %vm2602, %v2593, 0
  %vm2627 = vcmask 1043456
  %v2629 = vsel %vm2627, %v2594, 0
  %2631 = vmatprep.subr.bf16.mxu0 0
  %2632 = vmatpush1.bf16.msra.mxu0 0
  %2633 = vmatprep.subr.bf16.mxu0 0
  %2634 = vmatpush1.bf16.msra.mxu0 0
  %2635 = vmatprep.subr.bf16.mxu0 0
  %2636 = vmatpush1.bf16.msra.mxu0 0
  %2637 = vmatprep.subr.bf16.mxu0 0
  %2638 = vmatpush1.bf16.msra.mxu0 0
  %2639 = vmatprep.subr.bf16.mxu0 0
  %2640 = vmatpush1.bf16.msra.mxu0 0
  %2641 = vmatprep.subr.bf16.mxu0 0
  %2642 = vmatpush1.bf16.msra.mxu0 0
  %2643 = vmatprep.subr.bf16.mxu0 0
  %2644 = vmatpush1.bf16.msra.mxu0 0
  %2645 = vmatprep.subr.bf16.mxu0 0
  %2646 = vmatpush1.bf16.msra.mxu0 %v2629
  %2647 = vmatprep.subr.bf16.mxu0 0
  %2648 = vmatpush2.bf16.msra.mxu0 0
  %2649 = vmatprep.subr.bf16.mxu0 0
  %2650 = vmatpush2.bf16.msra.mxu0 0
  %2651 = vmatprep.subr.bf16.mxu0 0
  %2652 = vmatpush2.bf16.msra.mxu0 0
  %2653 = vmatprep.subr.bf16.mxu0 0
  %2654 = vmatpush2.bf16.msra.mxu0 0
  %2655 = vmatprep.subr.bf16.mxu0 0
  %2656 = vmatpush2.bf16.msra.mxu0 0
  %2657 = vmatprep.subr.bf16.mxu0 0
  %2658 = vmatpush2.bf16.msra.mxu0 0
  %2659 = vmatprep.subr.bf16.mxu0 0
  %2660 = vmatpush2.bf16.msra.mxu0 0
  %2661 = vmatprep.subr.bf16.mxu0 0
  %2662 = vmatpush2.bf16.msra.mxu0 0
  %2663 = vmatprep.mubr.bf16.mxu0 0
  %2664 = vmatmul.mubr.bf16.gmra.mxu0 %v2604
  %v2665 = vpop.f32.mrf.mxu0
  %v2666 = vadd.f32 %v2600, %v2665
  %v2667 = vpop.f32.mrf.mxu0
  %v2668 = vpop.f32.mrf.mxu0
  %v2669 = vadd.f32 %v2600, %v2668
  %v2670 = vpop.f32.mrf.mxu0
  %2671 = vmatprep.mubr.bf16.mxu0 0
  %2672 = vmatmul.mubr.bf16.gmra.mxu0 %v2607
  %v2673 = vpop.f32.mrf.mxu0
  %v2674 = vadd.f32 %v2600, %v2673
  %v2675 = vpop.f32.mrf.mxu0
  %v2676 = vpop.f32.mrf.mxu0
  %v2677 = vadd.f32 %v2600, %v2676
  %v2678 = vpop.f32.mrf.mxu0
  %2679 = vmatprep.mubr.bf16.mxu0 0
  %2680 = vmatmul.mubr.bf16.gmra.mxu0 %v2610
  %v2681 = vpop.f32.mrf.mxu0
  %v2682 = vadd.f32 %v2600, %v2681
  %v2683 = vpop.f32.mrf.mxu0
  %v2684 = vpop.f32.mrf.mxu0
  %v2685 = vadd.f32 %v2600, %v2684
  %v2686 = vpop.f32.mrf.mxu0
  %2687 = vmatprep.mubr.bf16.mxu0 0
  %2688 = vmatmul.mubr.bf16.gmra.mxu0 %v2613
  %v2689 = vpop.f32.mrf.mxu0
  %v2690 = vadd.f32 %v2600, %v2689
  %v2691 = vpop.f32.mrf.mxu0
  %v2692 = vpop.f32.mrf.mxu0
  %v2693 = vadd.f32 %v2600, %v2692
  %v2694 = vpop.f32.mrf.mxu0
  %2695 = vmatprep.mubr.bf16.mxu0 0
  %2696 = vmatmul.mubr.bf16.gmra.mxu0 %v2616
  %v2697 = vpop.f32.mrf.mxu0
  %v2698 = vadd.f32 %v2600, %v2697
  %v2699 = vpop.f32.mrf.mxu0
  %v2700 = vpop.f32.mrf.mxu0
  %v2701 = vadd.f32 %v2600, %v2700
  %v2702 = vpop.f32.mrf.mxu0
  %2703 = vmatprep.mubr.bf16.mxu0 0
  %2704 = vmatmul.mubr.bf16.gmra.mxu0 %v2619
  %v2705 = vpop.f32.mrf.mxu0
  %v2706 = vadd.f32 %v2600, %v2705
  %v2707 = vpop.f32.mrf.mxu0
  %v2708 = vpop.f32.mrf.mxu0
  %v2709 = vadd.f32 %v2600, %v2708
  %v2710 = vpop.f32.mrf.mxu0
  %2711 = vmatprep.mubr.bf16.mxu0 0
  %2712 = vmatmul.mubr.bf16.gmra.mxu0 %v2622
  %v2713 = vpop.f32.mrf.mxu0
  %v2714 = vadd.f32 %v2600, %v2713
  %v2715 = vpop.f32.mrf.mxu0
  %v2716 = vpop.f32.mrf.mxu0
  %v2717 = vadd.f32 %v2600, %v2716
  %v2718 = vpop.f32.mrf.mxu0
  %2719 = vmatprep.mubr.bf16.mxu0 0
  %2720 = vmatmul.mubr.bf16.gmra.mxu0 %v2625
  %v2721 = vpop.f32.mrf.mxu0
  %v2722 = vadd.f32 %v2600, %v2721
  %v2723 = vpop.f32.mrf.mxu0
  %v2724 = vpop.f32.mrf.mxu0
  %v2725 = vadd.f32 %v2600, %v2724
  %v2726 = vpop.f32.mrf.mxu0
  %2727 = vdwg.mxu0
  %vm2728 = vcmask 130048
  %v2729 = vsel %vm2728, %v2666, -inf
  %2730 = vmax.xlane.f32.xlu0 %v2729
  %v2731 = vpop.xlane.xlu0 %2730
  %v2732 = vsel %vm2728, %v2669, -inf
  %2733 = vmax.xlane.f32.xlu0 %v2732
  %v2734 = vpop.xlane.xlu0 %2733
  %v2735 = vsel %vm2728, %v2674, -inf
  %2736 = vmax.xlane.f32.xlu0 %v2735
  %v2737 = vpop.xlane.xlu0 %2736
  %v2738 = vsel %vm2728, %v2677, -inf
  %2739 = vmax.xlane.f32.xlu0 %v2738
  %v2740 = vpop.xlane.xlu0 %2739
  %v2741 = vsel %vm2728, %v2682, -inf
  %2742 = vmax.xlane.f32.xlu0 %v2741
  %v2743 = vpop.xlane.xlu0 %2742
  %v2744 = vsel %vm2728, %v2685, -inf
  %2745 = vmax.xlane.f32.xlu0 %v2744
  %v2746 = vpop.xlane.xlu0 %2745
  %v2747 = vsel %vm2728, %v2690, -inf
  %2748 = vmax.xlane.f32.xlu0 %v2747
  %v2749 = vpop.xlane.xlu0 %2748
  %v2750 = vsel %vm2728, %v2693, -inf
  %2751 = vmax.xlane.f32.xlu0 %v2750
  %v2752 = vpop.xlane.xlu0 %2751
  %v2753 = vsel %vm2728, %v2698, -inf
  %2754 = vmax.xlane.f32.xlu0 %v2753
  %v2755 = vpop.xlane.xlu0 %2754
  %v2756 = vsel %vm2728, %v2701, -inf
  %2757 = vmax.xlane.f32.xlu0 %v2756
  %v2758 = vpop.xlane.xlu0 %2757
  %v2759 = vsel %vm2728, %v2706, -inf
  %2760 = vmax.xlane.f32.xlu0 %v2759
  %v2761 = vpop.xlane.xlu0 %2760
  %v2762 = vsel %vm2728, %v2709, -inf
  %2763 = vmax.xlane.f32.xlu0 %v2762
  %v2764 = vpop.xlane.xlu0 %2763
  %v2765 = vsel %vm2728, %v2714, -inf
  %2766 = vmax.xlane.f32.xlu0 %v2765
  %v2767 = vpop.xlane.xlu0 %2766
  %v2768 = vsel %vm2728, %v2717, -inf
  %2769 = vmax.xlane.f32.xlu0 %v2768
  %v2770 = vpop.xlane.xlu0 %2769
  %v2771 = vsel %vm2728, %v2722, -inf
  %2772 = vmax.xlane.f32.xlu0 %v2771
  %v2773 = vpop.xlane.xlu0 %2772
  %v2774 = vsel %vm2728, %v2725, -inf
  %2775 = vmax.xlane.f32.xlu0 %v2774
  %v2776 = vpop.xlane.xlu0 %2775
  %v2777 = vsub.f32 %v2666, %v2731
  %v2778 = vsub.f32 %v2669, %v2734
  %v2779 = vsub.f32 %v2674, %v2737
  %v2780 = vsub.f32 %v2677, %v2740
  %v2781 = vsub.f32 %v2682, %v2743
  %v2782 = vsub.f32 %v2685, %v2746
  %v2783 = vsub.f32 %v2690, %v2749
  %v2784 = vsub.f32 %v2693, %v2752
  %v2785 = vsub.f32 %v2698, %v2755
  %v2786 = vsub.f32 %v2701, %v2758
  %v2787 = vsub.f32 %v2706, %v2761
  %v2788 = vsub.f32 %v2709, %v2764
  %v2789 = vsub.f32 %v2714, %v2767
  %v2790 = vsub.f32 %v2717, %v2770
  %v2791 = vsub.f32 %v2722, %v2773
  %v2792 = vsub.f32 %v2725, %v2776
  %v2793 = vmul.f32 %v2777, 1.442695
  %v2794 = vpow.pop %v2793
  %v2795 = vmul.f32 %v2778, 1.442695
  %v2796 = vpow.pop %v2795
  %v2797 = vmul.f32 %v2779, 1.442695
  %v2798 = vpow.pop %v2797
  %v2799 = vmul.f32 %v2780, 1.442695
  %v2800 = vpow.pop %v2799
  %v2801 = vmul.f32 %v2781, 1.442695
  %v2802 = vpow.pop %v2801
  %v2803 = vmul.f32 %v2782, 1.442695
  %v2804 = vpow.pop %v2803
  %v2805 = vmul.f32 %v2783, 1.442695
  %v2806 = vpow.pop %v2805
  %v2807 = vmul.f32 %v2784, 1.442695
  %v2808 = vpow.pop %v2807
  %v2809 = vmul.f32 %v2785, 1.442695
  %v2810 = vpow.pop %v2809
  %v2811 = vmul.f32 %v2786, 1.442695
  %v2812 = vpow.pop %v2811
  %v2813 = vmul.f32 %v2787, 1.442695
  %v2814 = vpow.pop %v2813
  %v2815 = vmul.f32 %v2788, 1.442695
  %v2816 = vpow.pop %v2815
  %v2817 = vmul.f32 %v2789, 1.442695
  %v2818 = vpow.pop %v2817
  %v2819 = vmul.f32 %v2790, 1.442695
  %v2820 = vpow.pop %v2819
  %v2821 = vmul.f32 %v2791, 1.442695
  %v2822 = vpow.pop %v2821
  %v2823 = vmul.f32 %v2792, 1.442695
  %v2824 = vpow.pop %v2823
  %v2825 = vsel %vm2728, %v2794, 0.0
  %2826 = vadd.xlane.f32.xlu0 %v2825
  %v2827 = vpop.xlane.xlu0 %2826
  %v2828 = vsel %vm2728, %v2796, 0.0
  %2829 = vadd.xlane.f32.xlu0 %v2828
  %v2830 = vpop.xlane.xlu0 %2829
  %v2831 = vsel %vm2728, %v2798, 0.0
  %2832 = vadd.xlane.f32.xlu0 %v2831
  %v2833 = vpop.xlane.xlu0 %2832
  %v2834 = vsel %vm2728, %v2800, 0.0
  %2835 = vadd.xlane.f32.xlu0 %v2834
  %v2836 = vpop.xlane.xlu0 %2835
  %v2837 = vsel %vm2728, %v2802, 0.0
  %2838 = vadd.xlane.f32.xlu0 %v2837
  %v2839 = vpop.xlane.xlu0 %2838
  %v2840 = vsel %vm2728, %v2804, 0.0
  %2841 = vadd.xlane.f32.xlu0 %v2840
  %v2842 = vpop.xlane.xlu0 %2841
  %v2843 = vsel %vm2728, %v2806, 0.0
  %2844 = vadd.xlane.f32.xlu0 %v2843
  %v2845 = vpop.xlane.xlu0 %2844
  %v2846 = vsel %vm2728, %v2808, 0.0
  %2847 = vadd.xlane.f32.xlu0 %v2846
  %v2848 = vpop.xlane.xlu0 %2847
  %v2849 = vsel %vm2728, %v2810, 0.0
  %2850 = vadd.xlane.f32.xlu0 %v2849
  %v2851 = vpop.xlane.xlu0 %2850
  %v2852 = vsel %vm2728, %v2812, 0.0
  %2853 = vadd.xlane.f32.xlu0 %v2852
  %v2854 = vpop.xlane.xlu0 %2853
  %v2855 = vsel %vm2728, %v2814, 0.0
  %2856 = vadd.xlane.f32.xlu0 %v2855
  %v2857 = vpop.xlane.xlu0 %2856
  %v2858 = vsel %vm2728, %v2816, 0.0
  %2859 = vadd.xlane.f32.xlu0 %v2858
  %v2860 = vpop.xlane.xlu0 %2859
  %v2861 = vsel %vm2728, %v2818, 0.0
  %2862 = vadd.xlane.f32.xlu0 %v2861
  %v2863 = vpop.xlane.xlu0 %2862
  %v2864 = vsel %vm2728, %v2820, 0.0
  %2865 = vadd.xlane.f32.xlu0 %v2864
  %v2866 = vpop.xlane.xlu0 %2865
  %v2867 = vsel %vm2728, %v2822, 0.0
  %2868 = vadd.xlane.f32.xlu0 %v2867
  %v2869 = vpop.xlane.xlu0 %2868
  %v2870 = vsel %vm2728, %v2824, 0.0
  %2871 = vadd.xlane.f32.xlu0 %v2870
  %v2872 = vpop.xlane.xlu0 %2871
  %v2873 = vlog2.pop %v2827
  %v2874 = vmul.f32 %v2873, 0.6931472
  %v2875 = vlog2.pop %v2830
  %v2876 = vmul.f32 %v2875, 0.6931472
  %v2877 = vlog2.pop %v2833
  %v2878 = vmul.f32 %v2877, 0.6931472
  %v2879 = vlog2.pop %v2836
  %v2880 = vmul.f32 %v2879, 0.6931472
  %v2881 = vlog2.pop %v2839
  %v2882 = vmul.f32 %v2881, 0.6931472
  %v2883 = vlog2.pop %v2842
  %v2884 = vmul.f32 %v2883, 0.6931472
  %v2885 = vlog2.pop %v2845
  %v2886 = vmul.f32 %v2885, 0.6931472
  %v2887 = vlog2.pop %v2848
  %v2888 = vmul.f32 %v2887, 0.6931472
  %v2889 = vlog2.pop %v2851
  %v2890 = vmul.f32 %v2889, 0.6931472
  %v2891 = vlog2.pop %v2854
  %v2892 = vmul.f32 %v2891, 0.6931472
  %v2893 = vlog2.pop %v2857
  %v2894 = vmul.f32 %v2893, 0.6931472
  %v2895 = vlog2.pop %v2860
  %v2896 = vmul.f32 %v2895, 0.6931472
  %v2897 = vlog2.pop %v2863
  %v2898 = vmul.f32 %v2897, 0.6931472
  %v2899 = vlog2.pop %v2866
  %v2900 = vmul.f32 %v2899, 0.6931472
  %v2901 = vlog2.pop %v2869
  %v2902 = vmul.f32 %v2901, 0.6931472
  %v2903 = vlog2.pop %v2872
  %v2904 = vmul.f32 %v2903, 0.6931472
  %v2905 = vsub.f32 %v2777, %v2874
  %v2906 = vsub.f32 %v2778, %v2876
  %v2907 = vsub.f32 %v2779, %v2878
  %v2908 = vsub.f32 %v2780, %v2880
  %v2909 = vsub.f32 %v2781, %v2882
  %v2910 = vsub.f32 %v2782, %v2884
  %v2911 = vsub.f32 %v2783, %v2886
  %v2912 = vsub.f32 %v2784, %v2888
  %v2913 = vsub.f32 %v2785, %v2890
  %v2914 = vsub.f32 %v2786, %v2892
  %v2915 = vsub.f32 %v2787, %v2894
  %v2916 = vsub.f32 %v2788, %v2896
  %v2917 = vsub.f32 %v2789, %v2898
  %v2918 = vsub.f32 %v2790, %v2900
  %v2919 = vsub.f32 %v2791, %v2902
  %v2920 = vsub.f32 %v2792, %v2904
  %2921 = vst.msk [vmem:[%s5] sm:$0xff] %vm2728, %v2905
  %2922 = vst.msk [vmem:[%s5 + $0x8] sm:$0xff] %vm2728, %v2906
  %2923 = vst.msk [vmem:[%s5 + $0x10] sm:$0xff] %vm2728, %v2907
  %2924 = vst.msk [vmem:[%s5 + $0x18] sm:$0xff] %vm2728, %v2908
  %2925 = vst.msk [vmem:[%s5 + $0x20] sm:$0xff] %vm2728, %v2909
  %2926 = vst.msk [vmem:[%s5 + $0x28] sm:$0xff] %vm2728, %v2910
  %2927 = vst.msk [vmem:[%s5 + $0x30] sm:$0xff] %vm2728, %v2911
  %2928 = vst.msk [vmem:[%s5 + $0x38] sm:$0xff] %vm2728, %v2912
  %2929 = vst.msk [vmem:[%s5 + $0x40] sm:$0xff] %vm2728, %v2913
  %2930 = vst.msk [vmem:[%s5 + $0x48] sm:$0xff] %vm2728, %v2914
  %2931 = vst.msk [vmem:[%s5 + $0x50] sm:$0xff] %vm2728, %v2915
  %2932 = vst.msk [vmem:[%s5 + $0x58] sm:$0xff] %vm2728, %v2916
  %2933 = vst.msk [vmem:[%s5 + $0x60] sm:$0xff] %vm2728, %v2917
  %2934 = vst.msk [vmem:[%s5 + $0x68] sm:$0xff] %vm2728, %v2918
  %2935 = vst.msk [vmem:[%s5 + $0x70] sm:$0xff] %vm2728, %v2919
  %2936 = vst.msk [vmem:[%s5 + $0x78] sm:$0xff] %vm2728, %v2920
  // Predicated region
  $region22: #{tpu_custom_call.1} parent=0 // pred_check
    _
  $region23: #{tpu_custom_call.1} parent=0 // pred_check_branch
    %2938 = sbr.rel (0) target = $region25
  $region24: #{tpu_custom_call.1} parent=0 // pred_region
    _
  $region25: #{tpu_custom_call.1} parent=0 // pred_fallthru
    _
  // Predicated region
  $region26: #{tpu_custom_call.1} parent=0 // pred_check
    _
  $region27: #{tpu_custom_call.1} parent=0 // pred_check_branch
    %2940 = sbr.rel (0) target = $region29
  $region28: #{tpu_custom_call.1} parent=0 // pred_region
    _
  $region29: #{tpu_custom_call.1} parent=0 // pred_fallthru
    _

</llo_original>
